<compile_context>
chip_gen: v6e
topology: v6e:2x2x1
jax: 0.10.0
libtpu: 0.0.40
codegen_flags: <defaults>
</compile_context>

<pallas_src>
import functools

import jax
import jax.numpy as jnp
from jax import lax
from jax.experimental import pallas as pl
from jax.experimental.pallas import tpu as pltpu


def _cdiv(a, b):
    return -(-a // b)


# -----------------------------------------------------------------------------
# Pallas kernel: LSTM recurrence + 3-layer MLP decoder; final layer OUT-tiled.
# Everything except the w3 tile / b3 tile / out tile is identical across grid
# steps; the cheap LSTM + hidden layers are recomputed per step so the OUT
# grid axis can be sharded across TensorCores ("parallel").
# -----------------------------------------------------------------------------
def shred_kernel(
    x_ref,     # (T*Bp, S)   time-major sensor slab (row = t*Bp + b), f32
    wih_ref,   # (S, 4H)     LSTM input->hidden weights (transposed, i,f,g,o; g cols pre-scaled x2)
    whh_ref,   # (H, 4H)     LSTM hidden->hidden weights (transposed; g cols pre-scaled x2)
    b_ref,     # (1, 4H)     combined LSTM bias (b_ih + b_hh; g cols pre-scaled x2)
    w1_ref,    # (H, D1)     decoder layer 1 weight (transposed), f32
    b1_ref,    # (1, D1)
    w2_ref,    # (D1, D2)    decoder layer 2 weight (transposed), f32
    b2_ref,    # (1, D2)
    w3_ref,    # (D2, TN)    decoder output weight, OUT-tiled, bf16
    b3_ref,    # (1, TN)     output bias tile, f32
    out_ref,   # (Bp, TN)    reconstructed full-state tile, f32
):
    TB, _ = x_ref.shape
    H = whh_ref.shape[0]
    Bp = out_ref.shape[0]
    T = TB // Bp

    # Hoisted input projection: every timestep's x-gates in one matmul,
    # bias folded in once.  (T*Bp, 4H), PyTorch gate order i, f, g, o.
    xg = (
        jnp.dot(x_ref[...], wih_ref[...], preferred_element_type=jnp.float32)
        + b_ref[...]
    )
    whh = whh_ref[...]

    # Lane mask selecting the g-gate lanes; hoisted out of the loop.
    lane = lax.broadcasted_iota(jnp.int32, (Bp, 4 * H), 1)
    g_mask = (lane >= 2 * H) & (lane < 3 * H)

    # h, c live in vregs; T is static so the loop fully unrolls.
    h = jnp.zeros((Bp, H), jnp.float32)
    c = jnp.zeros((Bp, H), jnp.float32)
    for t in range(T):
        # One small MXU matmul + one (8,128)-sized gates vreg per step.
        gates = xg[t * Bp:(t + 1) * Bp, :] + jnp.dot(
            h, whh, preferred_element_type=jnp.float32
        )
        # Single full-vreg EUP pass.  The g-gate columns were pre-scaled by 2
        # in the wrapper, so on those lanes sigmoid(2g); the VPU fixup
        # 2*s - 1 == tanh(g).  Other lanes keep plain sigmoid.
        s = jax.nn.sigmoid(gates)
        act = jnp.where(g_mask, 2.0 * s - 1.0, s)
        i_g = act[:, 0 * H:1 * H]
        f_g = act[:, 1 * H:2 * H]
        g_g = act[:, 2 * H:3 * H]
        o_g = act[:, 3 * H:4 * H]
        c = f_g * c + i_g * g_g
        h = o_g * jnp.tanh(c)

    # Shallow decoder hidden layers (dropout is identity at inference).
    z1 = jnp.maximum(
        jnp.dot(h, w1_ref[...], preferred_element_type=jnp.float32) + b1_ref[...],
        0.0,
    )
    z2 = jnp.maximum(
        jnp.dot(z1, w2_ref[...], preferred_element_type=jnp.float32) + b2_ref[...],
        0.0,
    )

    # Final (dominant) Linear: bf16 weights streamed from HBM, bf16 LHS,
    # f32 accumulation on the MXU.
    out_ref[...] = (
        jnp.dot(
            z2.astype(jnp.bfloat16), w3_ref[...],
            preferred_element_type=jnp.float32,
        )
        + b3_ref[...]
    ).astype(out_ref.dtype)


# -----------------------------------------------------------------------------
# Wrapper: batch padding, time-major layout, gate pre-scale, OUT padding/tiling.
# -----------------------------------------------------------------------------
@functools.partial(jax.jit, static_argnames=("hidden_size", "out_tile"))
def shred_forward(x, params, *, hidden_size, out_tile=None):
    """x: (B, T, S) batch-first sensor trajectories (PyTorch convention)."""
    B, T, S = x.shape
    H = hidden_size
    wih_t, whh_t, b, w1_t, b1, w2_t, b2, w3_t, b3 = params
    D1 = w1_t.shape[1]
    D2 = w2_t.shape[1]
    OUT = w3_t.shape[1]

    # Pad batch to a full sublane tile so matmul M-dims / output stores are
    # unmasked; padded rows are sliced off on return.
    Bp = max(8, _cdiv(B, 8) * 8)
    x_p = jnp.pad(x, ((0, Bp - B), (0, 0), (0, 0)))
    # Time-major flat slab (row = t*Bp + b): a few-KB relayout fused by XLA,
    # which lets the kernel slice each timestep's gates as one aligned vreg.
    x_flat = jnp.transpose(x_p, (1, 0, 2)).reshape(T * Bp, S)

    # Fold a 2x scale into the g-gate columns so the kernel needs only ONE
    # sigmoid pass per recurrence step (tanh recovered as 2*sigmoid(2g)-1).
    g_scale = jnp.ones((4 * H,), jnp.float32).at[2 * H:3 * H].set(2.0)
    wih_s = wih_t * g_scale
    whh_s = whh_t * g_scale
    b_s = b * g_scale

    # --- OUT tiling: lane-dense tiles, zero-padded OUT, balanced widths. ---
    OUT_r = _cdiv(OUT, 128) * 128
    if out_tile is None:
        out_tile = 16384                      # bf16 tile = 2 MiB/buffer: fits
    out_tile = max(128, min(_cdiv(out_tile, 128) * 128, OUT_r))
    n_tiles = _cdiv(OUT_r, out_tile)
    out_tile = _cdiv(_cdiv(OUT_r, n_tiles), 128) * 128   # rebalance padding
    OUT_p = n_tiles * out_tile

    # bf16 output-layer weights (halves the dominant HBM stream); bias stays
    # f32 (negligible bytes). Padded columns are zero and sliced off below.
    w3_p = jnp.pad(w3_t, ((0, 0), (0, OUT_p - OUT))).astype(jnp.bfloat16)
    b3_p = jnp.pad(b3, ((0, 0), (0, OUT_p - OUT))).astype(jnp.float32)

    out = pl.pallas_call(
        shred_kernel,
        out_shape=jax.ShapeDtypeStruct((Bp, OUT_p), jnp.float32),
        grid=(n_tiles,),
        in_specs=[
            pl.BlockSpec((T * Bp, S), lambda j: (0, 0)),
            pl.BlockSpec((S, 4 * H), lambda j: (0, 0)),
            pl.BlockSpec((H, 4 * H), lambda j: (0, 0)),
            pl.BlockSpec((1, 4 * H), lambda j: (0, 0)),
            pl.BlockSpec((H, D1), lambda j: (0, 0)),
            pl.BlockSpec((1, D1), lambda j: (0, 0)),
            pl.BlockSpec((D1, D2), lambda j: (0, 0)),
            pl.BlockSpec((1, D2), lambda j: (0, 0)),
            pl.BlockSpec((D2, out_tile), lambda j: (0, j)),
            pl.BlockSpec((1, out_tile), lambda j: (0, j)),
        ],
        out_specs=pl.BlockSpec((Bp, out_tile), lambda j: (0, j)),
        compiler_params=pltpu.CompilerParams(
            # Every grid step is independent (LSTM + hidden layers recomputed
            # per tile), so the OUT axis is safely megacore-parallel on v7x.
            dimension_semantics=("parallel",),
        ),
    )(x_flat, wih_s, whh_s, b_s, w1_t, b1, w2_t, b2, w3_p, b3_p)
    return out[:B, :OUT]


# -----------------------------------------------------------------------------
# Pure-JAX reference (mirrors torch.nn.LSTM + SDN decoder semantics, all f32).
# -----------------------------------------------------------------------------
def shred_forward_ref(x, params, *, hidden_size):
    B, T, S = x.shape
    H = hidden_size
    wih_t, whh_t, b, w1_t, b1, w2_t, b2, w3_t, b3 = params

    h = jnp.zeros((B, H), jnp.float32)
    c = jnp.zeros((B, H), jnp.float32)
    for t in range(T):
        gates = x[:, t, :] @ wih_t + h @ whh_t + b[0]
        i_g = jax.nn.sigmoid(gates[:, 0 * H:1 * H])
        f_g = jax.nn.sigmoid(gates[:, 1 * H:2 * H])
        g_g = jnp.tanh(gates[:, 2 * H:3 * H])
        o_g = jax.nn.sigmoid(gates[:, 3 * H:4 * H])
        c = f_g * c + i_g * g_g
        h = o_g * jnp.tanh(c)

    z1 = jnp.maximum(h @ w1_t + b1[0], 0.0)
    z2 = jnp.maximum(z1 @ w2_t + b2[0], 0.0)
    return z2 @ w3_t + b3[0]


# -----------------------------------------------------------------------------
# Deterministic parameter construction (PyTorch-style uniform fan-in init).
# -----------------------------------------------------------------------------
def make_params(key, *, num_sensors, hidden_size, d1, d2, output_size):
    H = hidden_size
    ks = jax.random.split(key, 9)

    def unif(k, shape, fan_in):
        bound = 1.0 / jnp.sqrt(jnp.float32(fan_in))
        return jax.random.uniform(k, shape, jnp.float32, -bound, bound)

    # LSTM params (stored transposed for right-matmul in the kernel).
    wih_t = unif(ks[0], (num_sensors, 4 * H), H)
    whh_t = unif(ks[1], (H, 4 * H), H)
    b_ih = unif(ks[2], (4 * H,), H)
    b_hh = unif(ks[3], (4 * H,), H)
    b = (b_ih + b_hh).reshape(1, 4 * H)

    # Decoder (SDN) params (f32 master copies; the wrapper quantizes the
    # output-layer weights to bf16 for the HBM-bound stream).
    w1_t = unif(ks[4], (H, d1), H)
    b1 = unif(ks[5], (1, d1), H)
    w2_t = unif(ks[6], (d1, d2), d1)
    b2 = unif(ks[7], (1, d2), d1)
    w3_t = unif(ks[8], (d2, output_size), d2)
    b3 = jnp.zeros((1, output_size), jnp.float32)

    return (wih_t, whh_t, b, w1_t, b1, w2_t, b2, w3_t, b3)


if __name__ == "__main__":
    # Small shapes consistent with SHRED: batch=2, lags(seq)=8, sensors=4,
    # LSTM hidden=32, decoder hidden 64/64, output_size=256.
    B, T, S = 2, 8, 4
    H, D1, D2, OUT = 32, 64, 64, 256

    key = jax.random.PRNGKey(0)
    k_x, k_p = jax.random.split(key)
    x = jax.random.normal(k_x, (B, T, S), jnp.float32)
    params = make_params(
        k_p, num_sensors=S, hidden_size=H, d1=D1, d2=D2, output_size=OUT
    )

    # out_tile=128 exercises the OUT grid (2 steps) at demo size; production
    # output sizes use the 16384-wide default.
    out = shred_forward(x, params, hidden_size=H, out_tile=128)
    out = jax.block_until_ready(out)

    ref = shred_forward_ref(x, params, hidden_size=H)
    assert out.shape == (B, OUT)
    # Tolerance accounts for the bf16 output-layer weights/activations (the
    # rest of the pipeline runs in f32); bf16 rounding is ~0.4% relative.
    assert jnp.allclose(out, ref, rtol=1e-2, atol=1e-2), "Pallas vs JAX mismatch"

    # TODO(synk): RECONSTRUCTOR.fit() is a host-side training loop (DataLoader,
    # Adam, early stopping) and is intentionally not part of the kernel.
    print("KERNEL_OK")
</pallas_src>

<mosaic_0001>
module attributes {stable_mosaic.version = 11 : i64} {
  func.func @shred_kernel(%arg0: i32, %arg1: memref<64x4xf32, #tpu.memory_space<vmem>>, %arg2: memref<4x128xf32, #tpu.memory_space<vmem>>, %arg3: memref<32x128xf32, #tpu.memory_space<vmem>>, %arg4: memref<1x128xf32, #tpu.memory_space<vmem>>, %arg5: memref<32x64xf32, #tpu.memory_space<vmem>>, %arg6: memref<1x64xf32, #tpu.memory_space<vmem>>, %arg7: memref<64x64xf32, #tpu.memory_space<vmem>>, %arg8: memref<1x64xf32, #tpu.memory_space<vmem>>, %arg9: memref<64x128xbf16, #tpu.memory_space<vmem>>, %arg10: memref<1x128xf32, #tpu.memory_space<vmem>>, %arg11: memref<8x128xf32, #tpu.memory_space<vmem>>) attributes {dimension_semantics = [#tpu.dimension_semantics<parallel>], iteration_bounds = array<i64: 2>, scalar_prefetch = 0 : i64, scratch_operands = 0 : i64, tpu.core_type = #tpu.core_type<tc>, window_params = [{pipeline_mode = #tpu.pipeline_mode<synchronous>, transform_indices = @transform_0, window_bounds = array<i64: 64, 4>}, {pipeline_mode = #tpu.pipeline_mode<synchronous>, transform_indices = @transform_1, window_bounds = array<i64: 4, 128>}, {pipeline_mode = #tpu.pipeline_mode<synchronous>, transform_indices = @transform_2, window_bounds = array<i64: 32, 128>}, {pipeline_mode = #tpu.pipeline_mode<synchronous>, transform_indices = @transform_3, window_bounds = array<i64: 1, 128>}, {pipeline_mode = #tpu.pipeline_mode<synchronous>, transform_indices = @transform_4, window_bounds = array<i64: 32, 64>}, {pipeline_mode = #tpu.pipeline_mode<synchronous>, transform_indices = @transform_5, window_bounds = array<i64: 1, 64>}, {pipeline_mode = #tpu.pipeline_mode<synchronous>, transform_indices = @transform_6, window_bounds = array<i64: 64, 64>}, {pipeline_mode = #tpu.pipeline_mode<synchronous>, transform_indices = @transform_7, window_bounds = array<i64: 1, 64>}, {transform_indices = @transform_8, window_bounds = array<i64: 64, 128>}, {transform_indices = @transform_9, window_bounds = array<i64: 1, 128>}, {transform_indices = @transform_10, window_bounds = array<i64: 8, 128>}]} {
    %c0 = arith.constant 0 : index
    %c0_0 = arith.constant 0 : index
    %0 = vector.load %arg1[%c0, %c0_0] : memref<64x4xf32, #tpu.memory_space<vmem>>, vector<64x4xf32>
    %c0_1 = arith.constant 0 : index
    %c0_2 = arith.constant 0 : index
    %1 = vector.load %arg2[%c0_1, %c0_2] : memref<4x128xf32, #tpu.memory_space<vmem>>, vector<4x128xf32>
    %cst = arith.constant dense<0.000000e+00> : vector<64x128xf32>
    %2 = tpu.matmul %0, %1, %cst {dimension_numbers = #tpu.dot_dimension_numbers<[1], [0], [0], [1], [0, 0, 1, 1], [], []>} : vector<64x4xf32>, vector<4x128xf32>, vector<64x128xf32> -> vector<64x128xf32>
    %c0_3 = arith.constant 0 : index
    %c0_4 = arith.constant 0 : index
    %3 = vector.load %arg4[%c0_3, %c0_4] : memref<1x128xf32, #tpu.memory_space<vmem>>, vector<1x128xf32>
    %4 = vector.broadcast %3 : vector<1x128xf32> to vector<64x128xf32>
    %5 = arith.addf %2, %4 : vector<64x128xf32>
    %c0_5 = arith.constant 0 : index
    %c0_6 = arith.constant 0 : index
    %6 = vector.load %arg3[%c0_5, %c0_6] : memref<32x128xf32, #tpu.memory_space<vmem>>, vector<32x128xf32>
    %7 = tpu.iota {dimensions = array<i32: 1>} : vector<8x128xi32>
    %c64_i32 = arith.constant 64 : i32
    %8 = vector.broadcast %c64_i32 : i32 to vector<8x128xi32>
    %9 = arith.cmpi sge, %7, %8 : vector<8x128xi32>
    %c96_i32 = arith.constant 96 : i32
    %10 = vector.broadcast %c96_i32 : i32 to vector<8x128xi32>
    %11 = arith.cmpi slt, %7, %10 : vector<8x128xi32>
    %12 = arith.andi %9, %11 : vector<8x128xi1>
    %cst_7 = arith.constant 0.000000e+00 : f32
    %13 = vector.broadcast %cst_7 : f32 to vector<8x32xf32>
    %cst_8 = arith.constant 0.000000e+00 : f32
    %14 = vector.broadcast %cst_8 : f32 to vector<8x32xf32>
    %15 = vector.extract_strided_slice %5 {offsets = [0, 0], sizes = [8, 128], strides = [1, 1]} : vector<64x128xf32> to vector<8x128xf32>
    %cst_9 = arith.constant dense<0.000000e+00> : vector<8x128xf32>
    %16 = tpu.matmul %13, %6, %cst_9 {dimension_numbers = #tpu.dot_dimension_numbers<[1], [0], [0], [1], [0, 0, 1, 1], [], []>} : vector<8x32xf32>, vector<32x128xf32>, vector<8x128xf32> -> vector<8x128xf32>
    %17 = arith.addf %15, %16 : vector<8x128xf32>
    %18 = arith.negf %17 : vector<8x128xf32>
    %19 = math.exp %18 : vector<8x128xf32>
    %cst_10 = arith.constant 1.000000e+00 : f32
    %20 = vector.broadcast %cst_10 : f32 to vector<8x128xf32>
    %21 = arith.addf %20, %19 : vector<8x128xf32>
    %22 = arith.divf %20, %21 : vector<8x128xf32>
    %cst_11 = arith.constant 2.000000e+00 : f32
    %23 = vector.broadcast %cst_11 : f32 to vector<8x128xf32>
    %24 = arith.mulf %23, %22 : vector<8x128xf32>
    %cst_12 = arith.constant 1.000000e+00 : f32
    %25 = vector.broadcast %cst_12 : f32 to vector<8x128xf32>
    %26 = arith.subf %24, %25 : vector<8x128xf32>
    %27 = arith.select %12, %26, %22 : vector<8x128xi1>, vector<8x128xf32>
    %28 = vector.extract_strided_slice %27 {offsets = [0, 0], sizes = [8, 32], strides = [1, 1]} : vector<8x128xf32> to vector<8x32xf32>
    %29 = vector.extract_strided_slice %27 {offsets = [0, 32], sizes = [8, 32], strides = [1, 1]} : vector<8x128xf32> to vector<8x32xf32>
    %30 = vector.extract_strided_slice %27 {offsets = [0, 64], sizes = [8, 32], strides = [1, 1]} : vector<8x128xf32> to vector<8x32xf32>
    %31 = vector.extract_strided_slice %27 {offsets = [0, 96], sizes = [8, 32], strides = [1, 1]} : vector<8x128xf32> to vector<8x32xf32>
    %32 = arith.mulf %29, %14 : vector<8x32xf32>
    %33 = arith.mulf %28, %30 : vector<8x32xf32>
    %34 = arith.addf %32, %33 : vector<8x32xf32>
    %35 = math.tanh %34 : vector<8x32xf32>
    %36 = arith.mulf %31, %35 : vector<8x32xf32>
    %37 = vector.extract_strided_slice %5 {offsets = [8, 0], sizes = [8, 128], strides = [1, 1]} : vector<64x128xf32> to vector<8x128xf32>
    %cst_13 = arith.constant dense<0.000000e+00> : vector<8x128xf32>
    %38 = tpu.matmul %36, %6, %cst_13 {dimension_numbers = #tpu.dot_dimension_numbers<[1], [0], [0], [1], [0, 0, 1, 1], [], []>} : vector<8x32xf32>, vector<32x128xf32>, vector<8x128xf32> -> vector<8x128xf32>
    %39 = arith.addf %37, %38 : vector<8x128xf32>
    %40 = arith.negf %39 : vector<8x128xf32>
    %41 = math.exp %40 : vector<8x128xf32>
    %cst_14 = arith.constant 1.000000e+00 : f32
    %42 = vector.broadcast %cst_14 : f32 to vector<8x128xf32>
    %43 = arith.addf %42, %41 : vector<8x128xf32>
    %44 = arith.divf %42, %43 : vector<8x128xf32>
    %cst_15 = arith.constant 2.000000e+00 : f32
    %45 = vector.broadcast %cst_15 : f32 to vector<8x128xf32>
    %46 = arith.mulf %45, %44 : vector<8x128xf32>
    %cst_16 = arith.constant 1.000000e+00 : f32
    %47 = vector.broadcast %cst_16 : f32 to vector<8x128xf32>
    %48 = arith.subf %46, %47 : vector<8x128xf32>
    %49 = arith.select %12, %48, %44 : vector<8x128xi1>, vector<8x128xf32>
    %50 = vector.extract_strided_slice %49 {offsets = [0, 0], sizes = [8, 32], strides = [1, 1]} : vector<8x128xf32> to vector<8x32xf32>
    %51 = vector.extract_strided_slice %49 {offsets = [0, 32], sizes = [8, 32], strides = [1, 1]} : vector<8x128xf32> to vector<8x32xf32>
    %52 = vector.extract_strided_slice %49 {offsets = [0, 64], sizes = [8, 32], strides = [1, 1]} : vector<8x128xf32> to vector<8x32xf32>
    %53 = vector.extract_strided_slice %49 {offsets = [0, 96], sizes = [8, 32], strides = [1, 1]} : vector<8x128xf32> to vector<8x32xf32>
    %54 = arith.mulf %51, %34 : vector<8x32xf32>
    %55 = arith.mulf %50, %52 : vector<8x32xf32>
    %56 = arith.addf %54, %55 : vector<8x32xf32>
    %57 = math.tanh %56 : vector<8x32xf32>
    %58 = arith.mulf %53, %57 : vector<8x32xf32>
    %59 = vector.extract_strided_slice %5 {offsets = [16, 0], sizes = [8, 128], strides = [1, 1]} : vector<64x128xf32> to vector<8x128xf32>
    %cst_17 = arith.constant dense<0.000000e+00> : vector<8x128xf32>
    %60 = tpu.matmul %58, %6, %cst_17 {dimension_numbers = #tpu.dot_dimension_numbers<[1], [0], [0], [1], [0, 0, 1, 1], [], []>} : vector<8x32xf32>, vector<32x128xf32>, vector<8x128xf32> -> vector<8x128xf32>
    %61 = arith.addf %59, %60 : vector<8x128xf32>
    %62 = arith.negf %61 : vector<8x128xf32>
    %63 = math.exp %62 : vector<8x128xf32>
    %cst_18 = arith.constant 1.000000e+00 : f32
    %64 = vector.broadcast %cst_18 : f32 to vector<8x128xf32>
    %65 = arith.addf %64, %63 : vector<8x128xf32>
    %66 = arith.divf %64, %65 : vector<8x128xf32>
    %cst_19 = arith.constant 2.000000e+00 : f32
    %67 = vector.broadcast %cst_19 : f32 to vector<8x128xf32>
    %68 = arith.mulf %67, %66 : vector<8x128xf32>
    %cst_20 = arith.constant 1.000000e+00 : f32
    %69 = vector.broadcast %cst_20 : f32 to vector<8x128xf32>
    %70 = arith.subf %68, %69 : vector<8x128xf32>
    %71 = arith.select %12, %70, %66 : vector<8x128xi1>, vector<8x128xf32>
    %72 = vector.extract_strided_slice %71 {offsets = [0, 0], sizes = [8, 32], strides = [1, 1]} : vector<8x128xf32> to vector<8x32xf32>
    %73 = vector.extract_strided_slice %71 {offsets = [0, 32], sizes = [8, 32], strides = [1, 1]} : vector<8x128xf32> to vector<8x32xf32>
    %74 = vector.extract_strided_slice %71 {offsets = [0, 64], sizes = [8, 32], strides = [1, 1]} : vector<8x128xf32> to vector<8x32xf32>
    %75 = vector.extract_strided_slice %71 {offsets = [0, 96], sizes = [8, 32], strides = [1, 1]} : vector<8x128xf32> to vector<8x32xf32>
    %76 = arith.mulf %73, %56 : vector<8x32xf32>
    %77 = arith.mulf %72, %74 : vector<8x32xf32>
    %78 = arith.addf %76, %77 : vector<8x32xf32>
    %79 = math.tanh %78 : vector<8x32xf32>
    %80 = arith.mulf %75, %79 : vector<8x32xf32>
    %81 = vector.extract_strided_slice %5 {offsets = [24, 0], sizes = [8, 128], strides = [1, 1]} : vector<64x128xf32> to vector<8x128xf32>
    %cst_21 = arith.constant dense<0.000000e+00> : vector<8x128xf32>
    %82 = tpu.matmul %80, %6, %cst_21 {dimension_numbers = #tpu.dot_dimension_numbers<[1], [0], [0], [1], [0, 0, 1, 1], [], []>} : vector<8x32xf32>, vector<32x128xf32>, vector<8x128xf32> -> vector<8x128xf32>
    %83 = arith.addf %81, %82 : vector<8x128xf32>
    %84 = arith.negf %83 : vector<8x128xf32>
    %85 = math.exp %84 : vector<8x128xf32>
    %cst_22 = arith.constant 1.000000e+00 : f32
    %86 = vector.broadcast %cst_22 : f32 to vector<8x128xf32>
    %87 = arith.addf %86, %85 : vector<8x128xf32>
    %88 = arith.divf %86, %87 : vector<8x128xf32>
    %cst_23 = arith.constant 2.000000e+00 : f32
    %89 = vector.broadcast %cst_23 : f32 to vector<8x128xf32>
    %90 = arith.mulf %89, %88 : vector<8x128xf32>
    %cst_24 = arith.constant 1.000000e+00 : f32
    %91 = vector.broadcast %cst_24 : f32 to vector<8x128xf32>
    %92 = arith.subf %90, %91 : vector<8x128xf32>
    %93 = arith.select %12, %92, %88 : vector<8x128xi1>, vector<8x128xf32>
    %94 = vector.extract_strided_slice %93 {offsets = [0, 0], sizes = [8, 32], strides = [1, 1]} : vector<8x128xf32> to vector<8x32xf32>
    %95 = vector.extract_strided_slice %93 {offsets = [0, 32], sizes = [8, 32], strides = [1, 1]} : vector<8x128xf32> to vector<8x32xf32>
    %96 = vector.extract_strided_slice %93 {offsets = [0, 64], sizes = [8, 32], strides = [1, 1]} : vector<8x128xf32> to vector<8x32xf32>
    %97 = vector.extract_strided_slice %93 {offsets = [0, 96], sizes = [8, 32], strides = [1, 1]} : vector<8x128xf32> to vector<8x32xf32>
    %98 = arith.mulf %95, %78 : vector<8x32xf32>
    %99 = arith.mulf %94, %96 : vector<8x32xf32>
    %100 = arith.addf %98, %99 : vector<8x32xf32>
    %101 = math.tanh %100 : vector<8x32xf32>
    %102 = arith.mulf %97, %101 : vector<8x32xf32>
    %103 = vector.extract_strided_slice %5 {offsets = [32, 0], sizes = [8, 128], strides = [1, 1]} : vector<64x128xf32> to vector<8x128xf32>
    %cst_25 = arith.constant dense<0.000000e+00> : vector<8x128xf32>
    %104 = tpu.matmul %102, %6, %cst_25 {dimension_numbers = #tpu.dot_dimension_numbers<[1], [0], [0], [1], [0, 0, 1, 1], [], []>} : vector<8x32xf32>, vector<32x128xf32>, vector<8x128xf32> -> vector<8x128xf32>
    %105 = arith.addf %103, %104 : vector<8x128xf32>
    %106 = arith.negf %105 : vector<8x128xf32>
    %107 = math.exp %106 : vector<8x128xf32>
    %cst_26 = arith.constant 1.000000e+00 : f32
    %108 = vector.broadcast %cst_26 : f32 to vector<8x128xf32>
    %109 = arith.addf %108, %107 : vector<8x128xf32>
    %110 = arith.divf %108, %109 : vector<8x128xf32>
    %cst_27 = arith.constant 2.000000e+00 : f32
    %111 = vector.broadcast %cst_27 : f32 to vector<8x128xf32>
    %112 = arith.mulf %111, %110 : vector<8x128xf32>
    %cst_28 = arith.constant 1.000000e+00 : f32
    %113 = vector.broadcast %cst_28 : f32 to vector<8x128xf32>
    %114 = arith.subf %112, %113 : vector<8x128xf32>
    %115 = arith.select %12, %114, %110 : vector<8x128xi1>, vector<8x128xf32>
    %116 = vector.extract_strided_slice %115 {offsets = [0, 0], sizes = [8, 32], strides = [1, 1]} : vector<8x128xf32> to vector<8x32xf32>
    %117 = vector.extract_strided_slice %115 {offsets = [0, 32], sizes = [8, 32], strides = [1, 1]} : vector<8x128xf32> to vector<8x32xf32>
    %118 = vector.extract_strided_slice %115 {offsets = [0, 64], sizes = [8, 32], strides = [1, 1]} : vector<8x128xf32> to vector<8x32xf32>
    %119 = vector.extract_strided_slice %115 {offsets = [0, 96], sizes = [8, 32], strides = [1, 1]} : vector<8x128xf32> to vector<8x32xf32>
    %120 = arith.mulf %117, %100 : vector<8x32xf32>
    %121 = arith.mulf %116, %118 : vector<8x32xf32>
    %122 = arith.addf %120, %121 : vector<8x32xf32>
    %123 = math.tanh %122 : vector<8x32xf32>
    %124 = arith.mulf %119, %123 : vector<8x32xf32>
    %125 = vector.extract_strided_slice %5 {offsets = [40, 0], sizes = [8, 128], strides = [1, 1]} : vector<64x128xf32> to vector<8x128xf32>
    %cst_29 = arith.constant dense<0.000000e+00> : vector<8x128xf32>
    %126 = tpu.matmul %124, %6, %cst_29 {dimension_numbers = #tpu.dot_dimension_numbers<[1], [0], [0], [1], [0, 0, 1, 1], [], []>} : vector<8x32xf32>, vector<32x128xf32>, vector<8x128xf32> -> vector<8x128xf32>
    %127 = arith.addf %125, %126 : vector<8x128xf32>
    %128 = arith.negf %127 : vector<8x128xf32>
    %129 = math.exp %128 : vector<8x128xf32>
    %cst_30 = arith.constant 1.000000e+00 : f32
    %130 = vector.broadcast %cst_30 : f32 to vector<8x128xf32>
    %131 = arith.addf %130, %129 : vector<8x128xf32>
    %132 = arith.divf %130, %131 : vector<8x128xf32>
    %cst_31 = arith.constant 2.000000e+00 : f32
    %133 = vector.broadcast %cst_31 : f32 to vector<8x128xf32>
    %134 = arith.mulf %133, %132 : vector<8x128xf32>
    %cst_32 = arith.constant 1.000000e+00 : f32
    %135 = vector.broadcast %cst_32 : f32 to vector<8x128xf32>
    %136 = arith.subf %134, %135 : vector<8x128xf32>
    %137 = arith.select %12, %136, %132 : vector<8x128xi1>, vector<8x128xf32>
    %138 = vector.extract_strided_slice %137 {offsets = [0, 0], sizes = [8, 32], strides = [1, 1]} : vector<8x128xf32> to vector<8x32xf32>
    %139 = vector.extract_strided_slice %137 {offsets = [0, 32], sizes = [8, 32], strides = [1, 1]} : vector<8x128xf32> to vector<8x32xf32>
    %140 = vector.extract_strided_slice %137 {offsets = [0, 64], sizes = [8, 32], strides = [1, 1]} : vector<8x128xf32> to vector<8x32xf32>
    %141 = vector.extract_strided_slice %137 {offsets = [0, 96], sizes = [8, 32], strides = [1, 1]} : vector<8x128xf32> to vector<8x32xf32>
    %142 = arith.mulf %139, %122 : vector<8x32xf32>
    %143 = arith.mulf %138, %140 : vector<8x32xf32>
    %144 = arith.addf %142, %143 : vector<8x32xf32>
    %145 = math.tanh %144 : vector<8x32xf32>
    %146 = arith.mulf %141, %145 : vector<8x32xf32>
    %147 = vector.extract_strided_slice %5 {offsets = [48, 0], sizes = [8, 128], strides = [1, 1]} : vector<64x128xf32> to vector<8x128xf32>
    %cst_33 = arith.constant dense<0.000000e+00> : vector<8x128xf32>
    %148 = tpu.matmul %146, %6, %cst_33 {dimension_numbers = #tpu.dot_dimension_numbers<[1], [0], [0], [1], [0, 0, 1, 1], [], []>} : vector<8x32xf32>, vector<32x128xf32>, vector<8x128xf32> -> vector<8x128xf32>
    %149 = arith.addf %147, %148 : vector<8x128xf32>
    %150 = arith.negf %149 : vector<8x128xf32>
    %151 = math.exp %150 : vector<8x128xf32>
    %cst_34 = arith.constant 1.000000e+00 : f32
    %152 = vector.broadcast %cst_34 : f32 to vector<8x128xf32>
    %153 = arith.addf %152, %151 : vector<8x128xf32>
    %154 = arith.divf %152, %153 : vector<8x128xf32>
    %cst_35 = arith.constant 2.000000e+00 : f32
    %155 = vector.broadcast %cst_35 : f32 to vector<8x128xf32>
    %156 = arith.mulf %155, %154 : vector<8x128xf32>
    %cst_36 = arith.constant 1.000000e+00 : f32
    %157 = vector.broadcast %cst_36 : f32 to vector<8x128xf32>
    %158 = arith.subf %156, %157 : vector<8x128xf32>
    %159 = arith.select %12, %158, %154 : vector<8x128xi1>, vector<8x128xf32>
    %160 = vector.extract_strided_slice %159 {offsets = [0, 0], sizes = [8, 32], strides = [1, 1]} : vector<8x128xf32> to vector<8x32xf32>
    %161 = vector.extract_strided_slice %159 {offsets = [0, 32], sizes = [8, 32], strides = [1, 1]} : vector<8x128xf32> to vector<8x32xf32>
    %162 = vector.extract_strided_slice %159 {offsets = [0, 64], sizes = [8, 32], strides = [1, 1]} : vector<8x128xf32> to vector<8x32xf32>
    %163 = vector.extract_strided_slice %159 {offsets = [0, 96], sizes = [8, 32], strides = [1, 1]} : vector<8x128xf32> to vector<8x32xf32>
    %164 = arith.mulf %161, %144 : vector<8x32xf32>
    %165 = arith.mulf %160, %162 : vector<8x32xf32>
    %166 = arith.addf %164, %165 : vector<8x32xf32>
    %167 = math.tanh %166 : vector<8x32xf32>
    %168 = arith.mulf %163, %167 : vector<8x32xf32>
    %169 = vector.extract_strided_slice %5 {offsets = [56, 0], sizes = [8, 128], strides = [1, 1]} : vector<64x128xf32> to vector<8x128xf32>
    %cst_37 = arith.constant dense<0.000000e+00> : vector<8x128xf32>
    %170 = tpu.matmul %168, %6, %cst_37 {dimension_numbers = #tpu.dot_dimension_numbers<[1], [0], [0], [1], [0, 0, 1, 1], [], []>} : vector<8x32xf32>, vector<32x128xf32>, vector<8x128xf32> -> vector<8x128xf32>
    %171 = arith.addf %169, %170 : vector<8x128xf32>
    %172 = arith.negf %171 : vector<8x128xf32>
    %173 = math.exp %172 : vector<8x128xf32>
    %cst_38 = arith.constant 1.000000e+00 : f32
    %174 = vector.broadcast %cst_38 : f32 to vector<8x128xf32>
    %175 = arith.addf %174, %173 : vector<8x128xf32>
    %176 = arith.divf %174, %175 : vector<8x128xf32>
    %cst_39 = arith.constant 2.000000e+00 : f32
    %177 = vector.broadcast %cst_39 : f32 to vector<8x128xf32>
    %178 = arith.mulf %177, %176 : vector<8x128xf32>
    %cst_40 = arith.constant 1.000000e+00 : f32
    %179 = vector.broadcast %cst_40 : f32 to vector<8x128xf32>
    %180 = arith.subf %178, %179 : vector<8x128xf32>
    %181 = arith.select %12, %180, %176 : vector<8x128xi1>, vector<8x128xf32>
    %182 = vector.extract_strided_slice %181 {offsets = [0, 0], sizes = [8, 32], strides = [1, 1]} : vector<8x128xf32> to vector<8x32xf32>
    %183 = vector.extract_strided_slice %181 {offsets = [0, 32], sizes = [8, 32], strides = [1, 1]} : vector<8x128xf32> to vector<8x32xf32>
    %184 = vector.extract_strided_slice %181 {offsets = [0, 64], sizes = [8, 32], strides = [1, 1]} : vector<8x128xf32> to vector<8x32xf32>
    %185 = vector.extract_strided_slice %181 {offsets = [0, 96], sizes = [8, 32], strides = [1, 1]} : vector<8x128xf32> to vector<8x32xf32>
    %186 = arith.mulf %183, %166 : vector<8x32xf32>
    %187 = arith.mulf %182, %184 : vector<8x32xf32>
    %188 = arith.addf %186, %187 : vector<8x32xf32>
    %189 = math.tanh %188 : vector<8x32xf32>
    %190 = arith.mulf %185, %189 : vector<8x32xf32>
    %c0_41 = arith.constant 0 : index
    %c0_42 = arith.constant 0 : index
    %191 = vector.load %arg5[%c0_41, %c0_42] : memref<32x64xf32, #tpu.memory_space<vmem>>, vector<32x64xf32>
    %cst_43 = arith.constant dense<0.000000e+00> : vector<8x64xf32>
    %192 = tpu.matmul %190, %191, %cst_43 {dimension_numbers = #tpu.dot_dimension_numbers<[1], [0], [0], [1], [0, 0, 1, 1], [], []>} : vector<8x32xf32>, vector<32x64xf32>, vector<8x64xf32> -> vector<8x64xf32>
    %c0_44 = arith.constant 0 : index
    %c0_45 = arith.constant 0 : index
    %193 = vector.load %arg6[%c0_44, %c0_45] : memref<1x64xf32, #tpu.memory_space<vmem>>, vector<1x64xf32>
    %194 = vector.broadcast %193 : vector<1x64xf32> to vector<8x64xf32>
    %195 = arith.addf %192, %194 : vector<8x64xf32>
    %cst_46 = arith.constant 0.000000e+00 : f32
    %196 = vector.broadcast %cst_46 : f32 to vector<8x64xf32>
    %197 = arith.maximumf %195, %196 : vector<8x64xf32>
    %c0_47 = arith.constant 0 : index
    %c0_48 = arith.constant 0 : index
    %198 = vector.load %arg7[%c0_47, %c0_48] : memref<64x64xf32, #tpu.memory_space<vmem>>, vector<64x64xf32>
    %cst_49 = arith.constant dense<0.000000e+00> : vector<8x64xf32>
    %199 = tpu.matmul %197, %198, %cst_49 {dimension_numbers = #tpu.dot_dimension_numbers<[1], [0], [0], [1], [0, 0, 1, 1], [], []>} : vector<8x64xf32>, vector<64x64xf32>, vector<8x64xf32> -> vector<8x64xf32>
    %c0_50 = arith.constant 0 : index
    %c0_51 = arith.constant 0 : index
    %200 = vector.load %arg8[%c0_50, %c0_51] : memref<1x64xf32, #tpu.memory_space<vmem>>, vector<1x64xf32>
    %201 = vector.broadcast %200 : vector<1x64xf32> to vector<8x64xf32>
    %202 = arith.addf %199, %201 : vector<8x64xf32>
    %cst_52 = arith.constant 0.000000e+00 : f32
    %203 = vector.broadcast %cst_52 : f32 to vector<8x64xf32>
    %204 = arith.maximumf %202, %203 : vector<8x64xf32>
    %205 = arith.truncf %204 : vector<8x64xf32> to vector<8x64xbf16>
    %c0_53 = arith.constant 0 : index
    %c0_54 = arith.constant 0 : index
    %206 = vector.load %arg9[%c0_53, %c0_54] : memref<64x128xbf16, #tpu.memory_space<vmem>>, vector<64x128xbf16>
    %cst_55 = arith.constant dense<0.000000e+00> : vector<8x128xf32>
    %207 = tpu.matmul %205, %206, %cst_55 {dimension_numbers = #tpu.dot_dimension_numbers<[1], [0], [0], [1], [0, 0, 1, 1], [], []>} : vector<8x64xbf16>, vector<64x128xbf16>, vector<8x128xf32> -> vector<8x128xf32>
    %c0_56 = arith.constant 0 : index
    %c0_57 = arith.constant 0 : index
    %208 = vector.load %arg10[%c0_56, %c0_57] : memref<1x128xf32, #tpu.memory_space<vmem>>, vector<1x128xf32>
    %209 = vector.broadcast %208 : vector<1x128xf32> to vector<8x128xf32>
    %210 = arith.addf %207, %209 : vector<8x128xf32>
    %c0_58 = arith.constant 0 : index
    %c0_59 = arith.constant 0 : index
    %211 = vector.load %arg11[%c0_58, %c0_59] : memref<8x128xf32, #tpu.memory_space<vmem>>, vector<8x128xf32>
    tpu.vector_store %arg11[%c0_58, %c0_59], %210 {strides = array<i32>} : memref<8x128xf32, #tpu.memory_space<vmem>>, vector<8x128xf32>,
    return
  }
  func.func @transform_0(%arg0: i32) -> (i32, i32) {
    %c0_i32 = arith.constant 0 : i32
    %c0_i32_0 = arith.constant 0 : i32
    %c0_i32_1 = arith.constant 0 : i32
    return %c0_i32, %c0_i32_0 : i32, i32
  }
  func.func @transform_1(%arg0: i32) -> (i32, i32) {
    %c0_i32 = arith.constant 0 : i32
    %c0_i32_0 = arith.constant 0 : i32
    %c0_i32_1 = arith.constant 0 : i32
    return %c0_i32, %c0_i32_0 : i32, i32
  }
  func.func @transform_2(%arg0: i32) -> (i32, i32) {
    %c0_i32 = arith.constant 0 : i32
    %c0_i32_0 = arith.constant 0 : i32
    %c0_i32_1 = arith.constant 0 : i32
    return %c0_i32, %c0_i32_0 : i32, i32
  }
  func.func @transform_3(%arg0: i32) -> (i32, i32) {
    %c0_i32 = arith.constant 0 : i32
    %c0_i32_0 = arith.constant 0 : i32
    %c0_i32_1 = arith.constant 0 : i32
    return %c0_i32, %c0_i32_0 : i32, i32
  }
  func.func @transform_4(%arg0: i32) -> (i32, i32) {
    %c0_i32 = arith.constant 0 : i32
    %c0_i32_0 = arith.constant 0 : i32
    %c0_i32_1 = arith.constant 0 : i32
    return %c0_i32, %c0_i32_0 : i32, i32
  }
  func.func @transform_5(%arg0: i32) -> (i32, i32) {
    %c0_i32 = arith.constant 0 : i32
    %c0_i32_0 = arith.constant 0 : i32
    %c0_i32_1 = arith.constant 0 : i32
    return %c0_i32, %c0_i32_0 : i32, i32
  }
  func.func @transform_6(%arg0: i32) -> (i32, i32) {
    %c0_i32 = arith.constant 0 : i32
    %c0_i32_0 = arith.constant 0 : i32
    %c0_i32_1 = arith.constant 0 : i32
    return %c0_i32, %c0_i32_0 : i32, i32
  }
  func.func @transform_7(%arg0: i32) -> (i32, i32) {
    %c0_i32 = arith.constant 0 : i32
    %c0_i32_0 = arith.constant 0 : i32
    %c0_i32_1 = arith.constant 0 : i32
    return %c0_i32, %c0_i32_0 : i32, i32
  }
  func.func @transform_8(%arg0: i32) -> (i32, i32) {
    %c0_i32 = arith.constant 0 : i32
    %c0_i32_0 = arith.constant 0 : i32
    return %c0_i32, %arg0 : i32, i32
  }
  func.func @transform_9(%arg0: i32) -> (i32, i32) {
    %c0_i32 = arith.constant 0 : i32
    %c0_i32_0 = arith.constant 0 : i32
    return %c0_i32, %arg0 : i32, i32
  }
  func.func @transform_10(%arg0: i32) -> (i32, i32) {
    %c0_i32 = arith.constant 0 : i32
    %c0_i32_0 = arith.constant 0 : i32
    return %c0_i32, %arg0 : i32, i32
  }
}

</mosaic_0001>

<llo_original>
// kernel: mul.17
$region0: #{mul.17}
  #allocation2 [shape = 's32[1]{0}', space=sflag, size = 0x4, scoped, tag = 'scoped memory for mul.17']
  %s0 = inlined_call_operand.hbm [shape: f32[1,128], index: 0, kind: input, shape index: {}]
  %s1 = inlined_call_operand.vmem [shape: f32[1,128], index: 1, kind: input, shape index: {}]
  %s2 = inlined_call_operand.vmem [shape: f32[1,128], index: 2, kind: output, shape index: {}]
  $region1: #{mul.17} parent=0
    #allocation0 [shape = 'u8[512]{0}', space=vmem, size = 0x400, scoped, tag = 'operand span for operand 0']
    #allocation1 [shape = 's32[1]{0}', space=sflag, size = 0x4, scoped, tag = 'scoped memory for mul.17']
    %3 = vsyncpa [#allocation1], 0
    %s5 = ssub.s32 16, 16
    %6 = vsyncadd [#allocation1], %s5
    %s8 = sshll.u32 [#allocation0], 4
    %s9 = int_to_ptr.vmem [resolvable:$true] %s8
    %11 = dma.hbm_to_vmem [thread:$0]  %s0, 16, %s9, [#allocation1]
    %12 = dma.done [#allocation1], 16
    %v13 = vld [vmem:[#allocation0] sm:$0x1]
    %v14 = vld [vmem:[%s1] sm:$0x1]
    %15 = xla_tuple %v13, %v14
    %16 = xla_tuple %15
    %v17 = vmul.f32 %v13, %v14
    %18 = xla_tuple %v17
    %19 = vst [vmem:[%s2] sm:$0x1] %v17
    %20 = vsyncpa [#allocation1], 1

// kernel: shred_forward.1
$region0: #{shred_forward.1}
  #allocation0 [shape = 'u32[]', space=smem, size = 0x4, offset = 0x4, fixed_abs, tag = 'smem constant byte address 0x4 - core index']
  #allocation1 [shape = 'u32[144,128]{1,0:T(1,128)}', space=vmem, size = 0x12000, scoped, tag = 'internal scratch']
  %s0 = inlined_call_operand.vmem [shape: f32[64,4], index: 0, kind: input, shape index: {}]
  %s1 = inlined_call_operand.vmem [shape: f32[4,128], index: 1, kind: input, shape index: {}]
  %s2 = inlined_call_operand.vmem [shape: f32[32,128], index: 2, kind: input, shape index: {}]
  %s3 = inlined_call_operand.vmem [shape: f32[1,128], index: 3, kind: input, shape index: {}]
  %s4 = inlined_call_operand.vmem [shape: f32[32,64], index: 4, kind: input, shape index: {}]
  %s5 = inlined_call_operand.vmem [shape: f32[1,64], index: 5, kind: input, shape index: {}]
  %s6 = inlined_call_operand.vmem [shape: f32[64,64], index: 6, kind: input, shape index: {}]
  %s7 = inlined_call_operand.vmem [shape: f32[1,64], index: 7, kind: input, shape index: {}]
  %s8 = inlined_call_operand.vmem [shape: bf16[64,256], index: 8, kind: input, shape index: {}]
  %s9 = inlined_call_operand.vmem [shape: f32[1,256], index: 9, kind: input, shape index: {}]
  %s10 = inlined_call_operand.vmem [shape: f32[8,256], index: 10, kind: output, shape index: {}]
  %s11 = sld [smem:[#allocation0]]
  $region114: #{shred_forward.1} parent=0
    _
  %s13 = ssub.s32 1, %s11
  %s14 = scalar_select 0, %s13, %s11
  $region1: #{shred_forward.1} parent=0
    #allocation2 [shape = 'u8[32768]{0}', space=vmem, size = 0x8000, scoped, tag = 'input window, operand 8']
    loop: start=0, step=1, limit=4
    $region2: #{shred_forward.1} parent=1 // loop_pre_header
      _
    $region3: #{shred_forward.1} parent=1 // loop_header
      %s16 = sphi 0, %s20
      %p17 = scmp.ge.s32.totalorder %s16, 4
      %s24 = sphi 0, %s24
      %s26 = sphi 0, %s24
      %s27 = sphi 0, %s26
      %s41 = sphi 0, %s27
      %s45 = sphi 0, %s45
      %s47 = sphi 0, %s45
      %s48 = sphi 0, %s47
      %s62 = sphi 0, %s48
      %s66 = sphi 0, %s66
      %s68 = sphi 0, %s66
      %s69 = sphi 0, %s68
      %s83 = sphi 0, %s69
      %s87 = sphi 0, %s87
      %s89 = sphi 0, %s87
      %s90 = sphi 0, %s89
      %s104 = sphi 0, %s90
      %s108 = sphi 0, %s108
      %s110 = sphi 0, %s108
      %s111 = sphi 0, %s110
      %s125 = sphi 0, %s111
      %s129 = sphi 0, %s129
      %s131 = sphi 0, %s129
      %s132 = sphi 0, %s131
      %s146 = sphi 0, %s132
      %s150 = sphi 0, %s150
      %s152 = sphi 0, %s150
      %s153 = sphi 0, %s152
      %s167 = sphi 0, %s153
      %s171 = sphi 0, %s171
      %s173 = sphi 0, %s171
      %s174 = sphi 0, %s173
      %s188 = sphi 0, %s174
      %s194 = sphi 0, %s196
      %s197 = sphi 0, %s194
      %s198 = sphi 0, %s197
      %s214 = sphi 0, %s198
      %s220 = sphi 0, %s222
      %s223 = sphi 0, %s220
      %s224 = sphi 0, %s223
      %s240 = sphi 0, %s224
      %s246 = sphi 0, %s248
      %s249 = sphi 0, %s246
      %s250 = sphi 0, %s249
      %s266 = sphi 0, %s250
    $region4: #{shred_forward.1} parent=1 // loop_header_branch
      %19 = sbr.rel (%p17) target = $region8
    $region5: #{shred_forward.1} parent=1 // loop_body
      %s21 = ssub.s32 %s16, 1
      %s22 = ssub.s32 %s16, 2
      %s23 = sadd.s32 %s16, 1
      %s25 = sadd.s32 %s24, 1
      %p28 = scmp.eq.s32.totalorder %s16, 1
      %p29 = scmp.ne.s32.totalorder %s24, %s26
      %p30 = scmp.eq.s32.totalorder %s16, 0
      %p31 = por %p29, %p30
      %p32 = scmp.ne.s32.totalorder %s24, %s26
      %p33 = scmp.eq.s32.totalorder %s21, 1
      %p34 = por %p32, %p33
      %p35 = scmp.ne.s32.totalorder %s26, %s27
      %p36 = scmp.eq.s32.totalorder %s21, 0
      %p37 = por %p35, %p36
      %p38 = scmp.ne.s32.totalorder %s26, %s27
      %p39 = scmp.eq.s32.totalorder %s22, 1
      %p40 = por %p38, %p39
      %p42 = scmp.ne.s32.totalorder %s27, %s41
      %p43 = scmp.eq.s32.totalorder %s22, 0
      %p44 = por %p42, %p43
      %s46 = sadd.s32 %s45, 1
      %p49 = scmp.eq.s32.totalorder %s16, 1
      %p50 = scmp.ne.s32.totalorder %s45, %s47
      %p51 = scmp.eq.s32.totalorder %s16, 0
      %p52 = por %p50, %p51
      %p53 = scmp.ne.s32.totalorder %s45, %s47
      %p54 = scmp.eq.s32.totalorder %s21, 1
      %p55 = por %p53, %p54
      %p56 = scmp.ne.s32.totalorder %s47, %s48
      %p57 = scmp.eq.s32.totalorder %s21, 0
      %p58 = por %p56, %p57
      %p59 = scmp.ne.s32.totalorder %s47, %s48
      %p60 = scmp.eq.s32.totalorder %s22, 1
      %p61 = por %p59, %p60
      %p63 = scmp.ne.s32.totalorder %s48, %s62
      %p64 = scmp.eq.s32.totalorder %s22, 0
      %p65 = por %p63, %p64
      %s67 = sadd.s32 %s66, 1
      %p70 = scmp.eq.s32.totalorder %s16, 1
      %p71 = scmp.ne.s32.totalorder %s66, %s68
      %p72 = scmp.eq.s32.totalorder %s16, 0
      %p73 = por %p71, %p72
      %p74 = scmp.ne.s32.totalorder %s66, %s68
      %p75 = scmp.eq.s32.totalorder %s21, 1
      %p76 = por %p74, %p75
      %p77 = scmp.ne.s32.totalorder %s68, %s69
      %p78 = scmp.eq.s32.totalorder %s21, 0
      %p79 = por %p77, %p78
      %p80 = scmp.ne.s32.totalorder %s68, %s69
      %p81 = scmp.eq.s32.totalorder %s22, 1
      %p82 = por %p80, %p81
      %p84 = scmp.ne.s32.totalorder %s69, %s83
      %p85 = scmp.eq.s32.totalorder %s22, 0
      %p86 = por %p84, %p85
      %s88 = sadd.s32 %s87, 1
      %p91 = scmp.eq.s32.totalorder %s16, 1
      %p92 = scmp.ne.s32.totalorder %s87, %s89
      %p93 = scmp.eq.s32.totalorder %s16, 0
      %p94 = por %p92, %p93
      %p95 = scmp.ne.s32.totalorder %s87, %s89
      %p96 = scmp.eq.s32.totalorder %s21, 1
      %p97 = por %p95, %p96
      %p98 = scmp.ne.s32.totalorder %s89, %s90
      %p99 = scmp.eq.s32.totalorder %s21, 0
      %p100 = por %p98, %p99
      %p101 = scmp.ne.s32.totalorder %s89, %s90
      %p102 = scmp.eq.s32.totalorder %s22, 1
      %p103 = por %p101, %p102
      %p105 = scmp.ne.s32.totalorder %s90, %s104
      %p106 = scmp.eq.s32.totalorder %s22, 0
      %p107 = por %p105, %p106
      %s109 = sadd.s32 %s108, 1
      %p112 = scmp.eq.s32.totalorder %s16, 1
      %p113 = scmp.ne.s32.totalorder %s108, %s110
      %p114 = scmp.eq.s32.totalorder %s16, 0
      %p115 = por %p113, %p114
      %p116 = scmp.ne.s32.totalorder %s108, %s110
      %p117 = scmp.eq.s32.totalorder %s21, 1
      %p118 = por %p116, %p117
      %p119 = scmp.ne.s32.totalorder %s110, %s111
      %p120 = scmp.eq.s32.totalorder %s21, 0
      %p121 = por %p119, %p120
      %p122 = scmp.ne.s32.totalorder %s110, %s111
      %p123 = scmp.eq.s32.totalorder %s22, 1
      %p124 = por %p122, %p123
      %p126 = scmp.ne.s32.totalorder %s111, %s125
      %p127 = scmp.eq.s32.totalorder %s22, 0
      %p128 = por %p126, %p127
      %s130 = sadd.s32 %s129, 1
      %p133 = scmp.eq.s32.totalorder %s16, 1
      %p134 = scmp.ne.s32.totalorder %s129, %s131
      %p135 = scmp.eq.s32.totalorder %s16, 0
      %p136 = por %p134, %p135
      %p137 = scmp.ne.s32.totalorder %s129, %s131
      %p138 = scmp.eq.s32.totalorder %s21, 1
      %p139 = por %p137, %p138
      %p140 = scmp.ne.s32.totalorder %s131, %s132
      %p141 = scmp.eq.s32.totalorder %s21, 0
      %p142 = por %p140, %p141
      %p143 = scmp.ne.s32.totalorder %s131, %s132
      %p144 = scmp.eq.s32.totalorder %s22, 1
      %p145 = por %p143, %p144
      %p147 = scmp.ne.s32.totalorder %s132, %s146
      %p148 = scmp.eq.s32.totalorder %s22, 0
      %p149 = por %p147, %p148
      %s151 = sadd.s32 %s150, 1
      %p154 = scmp.eq.s32.totalorder %s16, 1
      %p155 = scmp.ne.s32.totalorder %s150, %s152
      %p156 = scmp.eq.s32.totalorder %s16, 0
      %p157 = por %p155, %p156
      %p158 = scmp.ne.s32.totalorder %s150, %s152
      %p159 = scmp.eq.s32.totalorder %s21, 1
      %p160 = por %p158, %p159
      %p161 = scmp.ne.s32.totalorder %s152, %s153
      %p162 = scmp.eq.s32.totalorder %s21, 0
      %p163 = por %p161, %p162
      %p164 = scmp.ne.s32.totalorder %s152, %s153
      %p165 = scmp.eq.s32.totalorder %s22, 1
      %p166 = por %p164, %p165
      %p168 = scmp.ne.s32.totalorder %s153, %s167
      %p169 = scmp.eq.s32.totalorder %s22, 0
      %p170 = por %p168, %p169
      %s172 = sadd.s32 %s171, 1
      %p175 = scmp.eq.s32.totalorder %s16, 1
      %p176 = scmp.ne.s32.totalorder %s171, %s173
      %p177 = scmp.eq.s32.totalorder %s16, 0
      %p178 = por %p176, %p177
      %p179 = scmp.ne.s32.totalorder %s171, %s173
      %p180 = scmp.eq.s32.totalorder %s21, 1
      %p181 = por %p179, %p180
      %p182 = scmp.ne.s32.totalorder %s173, %s174
      %p183 = scmp.eq.s32.totalorder %s21, 0
      %p184 = por %p182, %p183
      %p185 = scmp.ne.s32.totalorder %s173, %s174
      %p186 = scmp.eq.s32.totalorder %s22, 1
      %p187 = por %p185, %p186
      %p189 = scmp.ne.s32.totalorder %s174, %s188
      %p190 = scmp.eq.s32.totalorder %s22, 0
      %p191 = por %p189, %p190
      %s192 = ssub.s32 %s16, %s23
      %p193 = scmp.eq.s32.totalorder %s192, 0
      %s195 = sadd.s32 %s194, 1
      %s196 = scalar_select %p193, %s194, %s195
      %p199 = pneg %p193
      %p200 = scmp.eq.s32.totalorder %s16, 1
      %p201 = por %p199, %p200
      %p202 = scmp.ne.s32.totalorder %s194, %s197
      %p203 = scmp.eq.s32.totalorder %s16, 0
      %p204 = por %p202, %p203
      %p205 = scmp.ne.s32.totalorder %s194, %s197
      %p206 = scmp.eq.s32.totalorder %s21, 1
      %p207 = por %p205, %p206
      %p208 = scmp.ne.s32.totalorder %s197, %s198
      %p209 = scmp.eq.s32.totalorder %s21, 0
      %p210 = por %p208, %p209
      %p211 = scmp.ne.s32.totalorder %s197, %s198
      %p212 = scmp.eq.s32.totalorder %s22, 1
      %p213 = por %p211, %p212
      %p215 = scmp.ne.s32.totalorder %s198, %s214
      %p216 = scmp.eq.s32.totalorder %s22, 0
      %p217 = por %p215, %p216
      %s218 = ssub.s32 %s16, %s23
      %p219 = scmp.eq.s32.totalorder %s218, 0
      %s221 = sadd.s32 %s220, 1
      %s222 = scalar_select %p219, %s220, %s221
      %p225 = pneg %p219
      %p226 = scmp.eq.s32.totalorder %s16, 1
      %p227 = por %p225, %p226
      %p228 = scmp.ne.s32.totalorder %s220, %s223
      %p229 = scmp.eq.s32.totalorder %s16, 0
      %p230 = por %p228, %p229
      %p231 = scmp.ne.s32.totalorder %s220, %s223
      %p232 = scmp.eq.s32.totalorder %s21, 1
      %p233 = por %p231, %p232
      %p234 = scmp.ne.s32.totalorder %s223, %s224
      %p235 = scmp.eq.s32.totalorder %s21, 0
      %p236 = por %p234, %p235
      %p237 = scmp.ne.s32.totalorder %s223, %s224
      %p238 = scmp.eq.s32.totalorder %s22, 1
      %p239 = por %p237, %p238
      %p241 = scmp.ne.s32.totalorder %s224, %s240
      %p242 = scmp.eq.s32.totalorder %s22, 0
      %p243 = por %p241, %p242
      %s244 = ssub.s32 %s16, %s23
      %p245 = scmp.eq.s32.totalorder %s244, 0
      %s247 = sadd.s32 %s246, 1
      %s248 = scalar_select %p245, %s246, %s247
      %p251 = pneg %p245
      %p252 = scmp.eq.s32.totalorder %s16, 1
      %p253 = por %p251, %p252
      %p254 = scmp.ne.s32.totalorder %s246, %s249
      %p255 = scmp.eq.s32.totalorder %s16, 0
      %p256 = por %p254, %p255
      %p257 = scmp.ne.s32.totalorder %s246, %s249
      %p258 = scmp.eq.s32.totalorder %s21, 1
      %p259 = por %p257, %p258
      %p260 = scmp.ne.s32.totalorder %s249, %s250
      %p261 = scmp.eq.s32.totalorder %s21, 0
      %p262 = por %p260, %p261
      %p263 = scmp.ne.s32.totalorder %s249, %s250
      %p264 = scmp.eq.s32.totalorder %s22, 1
      %p265 = por %p263, %p264
      %p267 = scmp.ne.s32.totalorder %s250, %s266
      %p268 = scmp.eq.s32.totalorder %s22, 0
      %p269 = por %p267, %p268
      %p270 = scmp.le.s32.totalorder 1, %s16
      %p271 = scmp.lt.s32.totalorder %s16, 3
      %p272 = pnand %p270, %p271
      %p273 = pneg %p272
      // Predicated region
      $region9: #{shred_forward.1} parent=5 // pred_check
        _
      $region10: #{shred_forward.1} parent=5 // pred_check_branch
        %275 = sbr.rel (%p272) target = $region12
      $region11: #{shred_forward.1} parent=5 // pred_region
        %s276 = ssub.s32 %s16, 1
        // Predicated region
        $region13: #{shred_forward.1} parent=11 // pred_check
          %p277 = pneg %p37
        $region14: #{shred_forward.1} parent=11 // pred_check_branch
          %279 = sbr.rel (%p277) target = $region16
        $region15: #{shred_forward.1} parent=11 // pred_region
          _
        $region16: #{shred_forward.1} parent=11 // pred_fallthru
          _
        // Predicated region
        $region17: #{shred_forward.1} parent=11 // pred_check
          %p280 = pneg %p58
        $region18: #{shred_forward.1} parent=11 // pred_check_branch
          %282 = sbr.rel (%p280) target = $region20
        $region19: #{shred_forward.1} parent=11 // pred_region
          _
        $region20: #{shred_forward.1} parent=11 // pred_fallthru
          _
        // Predicated region
        $region21: #{shred_forward.1} parent=11 // pred_check
          %p283 = pneg %p79
        $region22: #{shred_forward.1} parent=11 // pred_check_branch
          %285 = sbr.rel (%p283) target = $region24
        $region23: #{shred_forward.1} parent=11 // pred_region
          _
        $region24: #{shred_forward.1} parent=11 // pred_fallthru
          _
        // Predicated region
        $region25: #{shred_forward.1} parent=11 // pred_check
          %p286 = pneg %p100
        $region26: #{shred_forward.1} parent=11 // pred_check_branch
          %288 = sbr.rel (%p286) target = $region28
        $region27: #{shred_forward.1} parent=11 // pred_region
          _
        $region28: #{shred_forward.1} parent=11 // pred_fallthru
          _
        // Predicated region
        $region29: #{shred_forward.1} parent=11 // pred_check
          %p289 = pneg %p121
        $region30: #{shred_forward.1} parent=11 // pred_check_branch
          %291 = sbr.rel (%p289) target = $region32
        $region31: #{shred_forward.1} parent=11 // pred_region
          _
        $region32: #{shred_forward.1} parent=11 // pred_fallthru
          _
        // Predicated region
        $region33: #{shred_forward.1} parent=11 // pred_check
          %p292 = pneg %p142
        $region34: #{shred_forward.1} parent=11 // pred_check_branch
          %294 = sbr.rel (%p292) target = $region36
        $region35: #{shred_forward.1} parent=11 // pred_region
          _
        $region36: #{shred_forward.1} parent=11 // pred_fallthru
          _
        // Predicated region
        $region37: #{shred_forward.1} parent=11 // pred_check
          %p295 = pneg %p163
        $region38: #{shred_forward.1} parent=11 // pred_check_branch
          %297 = sbr.rel (%p295) target = $region40
        $region39: #{shred_forward.1} parent=11 // pred_region
          _
        $region40: #{shred_forward.1} parent=11 // pred_fallthru
          _
        // Predicated region
        $region41: #{shred_forward.1} parent=11 // pred_check
          %p298 = pneg %p184
        $region42: #{shred_forward.1} parent=11 // pred_check_branch
          %300 = sbr.rel (%p298) target = $region44
        $region43: #{shred_forward.1} parent=11 // pred_region
          _
        $region44: #{shred_forward.1} parent=11 // pred_fallthru
          _
      $region12: #{shred_forward.1} parent=5 // pred_fallthru
        _
      %p301 = scmp.lt.s32.totalorder %s16, 2
      // Predicated region
      $region45: #{shred_forward.1} parent=5 // pred_check
        %p302 = pneg %p301
      $region46: #{shred_forward.1} parent=5 // pred_check_branch
        %304 = sbr.rel (%p302) target = $region48
      $region47: #{shred_forward.1} parent=5 // pred_region
        // Predicated region
        $region49: #{shred_forward.1} parent=47 // pred_check
          %p305 = pneg %p204
        $region50: #{shred_forward.1} parent=47 // pred_check_branch
          %307 = sbr.rel (%p305) target = $region52
        $region51: #{shred_forward.1} parent=47 // pred_region
          %s308 = sand.u32 %s194, 1
          %s309 = sand.u32 %s194, 1
          %s310 = smul.addr %s309, 32
          %s311 = scalar_lea.vmem [#allocation2], %s310
          %s312 = smul.addr %s16, 4
          %s313 = scalar_lea.vmem %s8, %s312
          // Predicated region
          $region53: #{shred_forward.1} parent=51 // pred_check
            _
          $region54: #{shred_forward.1} parent=51 // pred_check_branch
            %315 = sbr.rel (0) target = $region56
          $region55: #{shred_forward.1} parent=51 // pred_region
            // Predicated region
            $region57: #{shred_forward.1} parent=55 // pred_check
              _
            $region58: #{shred_forward.1} parent=55 // pred_check_branch
              %317 = sbr.rel target = $region60
            $region59: #{shred_forward.1} parent=55 // pred_region
              // Predicated region
              $region72: #{shred_forward.1} parent=59 // pred_check
                _
              $region73: #{shred_forward.1} parent=59 // pred_check_branch
                %347 = sbr.rel (0) target = $region75
              $region74: #{shred_forward.1} parent=59 // pred_region
                loop: start=0, step=1, limit=1
                $region76: #{shred_forward.1} parent=74 // loop_pre_header
                  _
                $region77: #{shred_forward.1} parent=74 // loop_header
                  %s349 = sphi 0, %s353
                  %p350 = scmp.ge.s32.totalorder %s349, 1
                  %s354 = sphi %s313, %s313
                  %s355 = sphi %s311, %s311
                $region78: #{shred_forward.1} parent=74 // loop_header_branch
                  %352 = sbr.rel (%p350) target = $region82
                $region79: #{shred_forward.1} parent=74 // loop_body
                  _
                $region80: #{shred_forward.1} parent=74 // loop_footer
                  %s353 = sadd.s32 1, %s349
                $region81: #{shred_forward.1} parent=74 // loop_footer_branch
                  %348 = sbr.rel target = $region77
                $region82: #{shred_forward.1} parent=74 // loop_exit
                  _
                %s357 = ssub.s32 16, 1
                loop: start=0, step=1, limit=1
                $region83: #{shred_forward.1} parent=74 // loop_pre_header
                  _
                $region84: #{shred_forward.1} parent=74 // loop_header
                  %s359 = sphi 0, %s363
                  %p360 = scmp.ge.s32.totalorder %s359, 1
                  %s364 = sphi %s313, %s313
                  %s365 = sphi %s311, %s311
                $region85: #{shred_forward.1} parent=74 // loop_header_branch
                  %362 = sbr.rel (%p360) target = $region89
                $region86: #{shred_forward.1} parent=74 // loop_body
                  %v366 = vld [vmem:[%s364] sm:%s357]
                  %367 = vst [vmem:[%s365] sm:%s357] %v366
                  %v368 = vld [vmem:[%s364 + $0x8] sm:%s357]
                  %369 = vst [vmem:[%s365 + $0x4] sm:%s357] %v368
                  %v370 = vld [vmem:[%s364 + $0x10] sm:%s357]
                  %371 = vst [vmem:[%s365 + $0x8] sm:%s357] %v370
                  %v372 = vld [vmem:[%s364 + $0x18] sm:%s357]
                  %373 = vst [vmem:[%s365 + $0xc] sm:%s357] %v372
                  %v374 = vld [vmem:[%s364 + $0x20] sm:%s357]
                  %375 = vst [vmem:[%s365 + $0x10] sm:%s357] %v374
                  %v376 = vld [vmem:[%s364 + $0x28] sm:%s357]
                  %377 = vst [vmem:[%s365 + $0x14] sm:%s357] %v376
                  %v378 = vld [vmem:[%s364 + $0x30] sm:%s357]
                  %379 = vst [vmem:[%s365 + $0x18] sm:%s357] %v378
                  %v380 = vld [vmem:[%s364 + $0x38] sm:%s357]
                  %381 = vst [vmem:[%s365 + $0x1c] sm:%s357] %v380
                $region87: #{shred_forward.1} parent=74 // loop_footer
                  %s363 = sadd.s32 1, %s359
                $region88: #{shred_forward.1} parent=74 // loop_footer_branch
                  %358 = sbr.rel target = $region84
                $region89: #{shred_forward.1} parent=74 // loop_exit
                  _
              $region75: #{shred_forward.1} parent=59 // pred_fallthru
                _
            $region60: #{shred_forward.1} parent=55 // pred_fallthru
              _
            // Predicated region
            $region61: #{shred_forward.1} parent=55 // pred_check
              _
            $region62: #{shred_forward.1} parent=55 // pred_check_branch
              %319 = sbr.rel (0) target = $region64
            $region63: #{shred_forward.1} parent=55 // pred_region
              %s321 = ssub.s32 16, 1
              loop: start=0, step=1, limit=1
              $region65: #{shred_forward.1} parent=63 // loop_pre_header
                _
              $region66: #{shred_forward.1} parent=63 // loop_header
                %s323 = sphi 0, %s327
                %p324 = scmp.ge.s32.totalorder %s323, 1
                %s328 = sphi %s313, %s313
                %s329 = sphi %s311, %s311
              $region67: #{shred_forward.1} parent=63 // loop_header_branch
                %326 = sbr.rel (%p324) target = $region71
              $region68: #{shred_forward.1} parent=63 // loop_body
                %v330 = vld [vmem:[%s328] sm:%s321]
                %331 = vst [vmem:[%s329] sm:%s321] %v330
                %v332 = vld [vmem:[%s328 + $0x8] sm:%s321]
                %333 = vst [vmem:[%s329 + $0x4] sm:%s321] %v332
                %v334 = vld [vmem:[%s328 + $0x10] sm:%s321]
                %335 = vst [vmem:[%s329 + $0x8] sm:%s321] %v334
                %v336 = vld [vmem:[%s328 + $0x18] sm:%s321]
                %337 = vst [vmem:[%s329 + $0xc] sm:%s321] %v336
                %v338 = vld [vmem:[%s328 + $0x20] sm:%s321]
                %339 = vst [vmem:[%s329 + $0x10] sm:%s321] %v338
                %v340 = vld [vmem:[%s328 + $0x28] sm:%s321]
                %341 = vst [vmem:[%s329 + $0x14] sm:%s321] %v340
                %v342 = vld [vmem:[%s328 + $0x30] sm:%s321]
                %343 = vst [vmem:[%s329 + $0x18] sm:%s321] %v342
                %v344 = vld [vmem:[%s328 + $0x38] sm:%s321]
                %345 = vst [vmem:[%s329 + $0x1c] sm:%s321] %v344
              $region69: #{shred_forward.1} parent=63 // loop_footer
                %s327 = sadd.s32 1, %s323
              $region70: #{shred_forward.1} parent=63 // loop_footer_branch
                %322 = sbr.rel target = $region66
              $region71: #{shred_forward.1} parent=63 // loop_exit
                _
            $region64: #{shred_forward.1} parent=55 // pred_fallthru
              _
          $region56: #{shred_forward.1} parent=51 // pred_fallthru
            _
          %382 = vnop
        $region52: #{shred_forward.1} parent=47 // pred_fallthru
          _
        // Predicated region
        $region90: #{shred_forward.1} parent=47 // pred_check
          %p383 = pneg %p230
        $region91: #{shred_forward.1} parent=47 // pred_check_branch
          %385 = sbr.rel (%p383) target = $region93
        $region92: #{shred_forward.1} parent=47 // pred_region
          %p386 = scmp.lt.s32.totalorder %s16, 1
          %s387 = scalar_select %p386, %s16, 1
          %s388 = scalar_lea.vmem %s9, %s387
        $region93: #{shred_forward.1} parent=47 // pred_fallthru
          _
      $region48: #{shred_forward.1} parent=5 // pred_fallthru
        _
      %p389 = scmp.le.s32.totalorder 1, %s16
      %p390 = scmp.lt.s32.totalorder %s16, 3
      %p391 = pnand %p389, %p390
      %p392 = pneg %p391
      // Predicated region
      $region94: #{shred_forward.1} parent=5 // pred_check
        _
      $region95: #{shred_forward.1} parent=5 // pred_check_branch
        %394 = sbr.rel (%p391) target = $region97
      $region96: #{shred_forward.1} parent=5 // pred_region
        %s395 = ssub.s32 %s16, 1
        %s396 = sand.u32 %s197, 1
        %s397 = sand.u32 %s197, 1
        %s398 = smul.addr %s397, 32
        %s399 = scalar_lea.vmem [#allocation2], %s398
        // Predicated region
        $region98: #{shred_forward.1} parent=96 // pred_check
          %p400 = pneg %p210
        $region99: #{shred_forward.1} parent=96 // pred_check_branch
          %402 = sbr.rel (%p400) target = $region101
        $region100: #{shred_forward.1} parent=96 // pred_region
          _
        $region101: #{shred_forward.1} parent=96 // pred_fallthru
          _
        %p403 = pneg %p37
        %p404 = pneg %p34
        %p405 = pneg %p58
        %p406 = pneg %p55
        %p407 = pneg %p79
        %p408 = pneg %p76
        %p409 = pneg %p100
        %p410 = pneg %p97
        %p411 = pneg %p121
        %p412 = pneg %p118
        %p413 = pneg %p142
        %p414 = pneg %p139
        %p415 = pneg %p163
        %p416 = pneg %p160
        %p417 = pneg %p184
        %p418 = pneg %p181
        %s419 = sand.u32 %s197, 1
        %s420 = sand.u32 %s197, 1
        %s421 = smul.addr %s420, 32
        %s422 = scalar_lea.vmem [#allocation2], %s421
        %p423 = pneg %p210
        %p424 = pneg %p207
        %p425 = scmp.lt.s32.totalorder %s21, 1
        %s426 = scalar_select %p425, %s21, 1
        %s427 = scalar_lea.vmem %s9, %s426
        %p428 = pneg %p236
        %p429 = pneg %p233
        %p430 = pneg %p262
        %p431 = pneg %p259
        %p432 = scmp.lt.s32.totalorder %s21, 1
        %s433 = scalar_select %p432, %s21, 1
        %s434 = smul.addr %s433, 8
        %s435 = scalar_lea.vmem %s10, %s434
        %p436 = scmp.lt.s32.totalorder %s21, 1
        %s437 = scalar_select %p436, %s21, 1
        %s438 = scalar_lea.vmem %s9, %s437
        %p439 = scmp.lt.s32.totalorder %s21, 1
        %s440 = scalar_select %p439, %s21, 1
        %s441 = smul.addr %s440, 8
        %s442 = scalar_lea.vmem %s10, %s441
        %v444 = vld [vmem:[%s0] sm:$0xff]
        %v445 = vld [vmem:[%s0 + $0x8] sm:$0xff]
        %v446 = vld [vmem:[%s0 + $0x10] sm:$0xff]
        %v447 = vld [vmem:[%s0 + $0x18] sm:$0xff]
        %v448 = vld [vmem:[%s0 + $0x20] sm:$0xff]
        %v449 = vld [vmem:[%s0 + $0x28] sm:$0xff]
        %v450 = vld [vmem:[%s0 + $0x30] sm:$0xff]
        %v451 = vld [vmem:[%s0 + $0x38] sm:$0xff]
        %v452 = vld [vmem:[%s1] sm:$0xf]
        %v453 = vld [vmem:[%s3] sm:$0x1]
        %v455 = vlaneseq
        %v456 = vshrl.u32 %v455, 7
        %v457 = vsub.s32 0, %v456
        %v458 = vrot.slane %v453, %v457
        %vm460 = vcmask 31744
        %v462 = vsel %vm460, %v444, 0
        %v465 = vsel %vm460, %v445, 0
        %v468 = vsel %vm460, %v446, 0
        %v471 = vsel %vm460, %v447, 0
        %v474 = vsel %vm460, %v448, 0
        %v477 = vsel %vm460, %v449, 0
        %v480 = vsel %vm460, %v450, 0
        %v483 = vsel %vm460, %v451, 0
        %vm485 = vcmask 1043456
        %v487 = vsel %vm485, %v452, 0
        %489 = vmatprep.subr.mxu0 0.0
        %490 = vmatpush1.msra.mxu0 0.0
        %491 = vmatprep.subr.mxu0 0.0
        %492 = vmatpush1.msra.mxu0 0.0
        %493 = vmatprep.subr.mxu0 0.0
        %494 = vmatpush1.msra.mxu0 0.0
        %495 = vmatprep.subr.mxu0 0.0
        %496 = vmatpush1.msra.mxu0 0.0
        %497 = vmatprep.subr.mxu0 0.0
        %498 = vmatpush1.msra.mxu0 0.0
        %499 = vmatprep.subr.mxu0 0.0
        %500 = vmatpush1.msra.mxu0 0.0
        %501 = vmatprep.subr.mxu0 0.0
        %502 = vmatpush1.msra.mxu0 0.0
        %503 = vmatprep.subr.mxu0 0.0
        %504 = vmatpush1.msra.mxu0 0.0
        %505 = vmatprep.subr.mxu0 0.0
        %506 = vmatpush1.msra.mxu0 0.0
        %507 = vmatprep.subr.mxu0 0.0
        %508 = vmatpush1.msra.mxu0 0.0
        %509 = vmatprep.subr.mxu0 0.0
        %510 = vmatpush1.msra.mxu0 0.0
        %511 = vmatprep.subr.mxu0 0.0
        %512 = vmatpush1.msra.mxu0 0.0
        %513 = vmatprep.subr.mxu0 0.0
        %514 = vmatpush1.msra.mxu0 0.0
        %515 = vmatprep.subr.mxu0 0.0
        %516 = vmatpush1.msra.mxu0 0.0
        %517 = vmatprep.subr.mxu0 0.0
        %518 = vmatpush1.msra.mxu0 0.0
        %519 = vmatprep.subr.mxu0 0.0
        %520 = vmatpush1.msra.mxu0 %v487
        %521 = vmatprep.subr.mxu0 0.0
        %522 = vmatpush2.msra.mxu0 0.0
        %523 = vmatprep.subr.mxu0 0.0
        %524 = vmatpush2.msra.mxu0 0.0
        %525 = vmatprep.subr.mxu0 0.0
        %526 = vmatpush2.msra.mxu0 0.0
        %527 = vmatprep.subr.mxu0 0.0
        %528 = vmatpush2.msra.mxu0 0.0
        %529 = vmatprep.subr.mxu0 0.0
        %530 = vmatpush2.msra.mxu0 0.0
        %531 = vmatprep.subr.mxu0 0.0
        %532 = vmatpush2.msra.mxu0 0.0
        %533 = vmatprep.subr.mxu0 0.0
        %534 = vmatpush2.msra.mxu0 0.0
        %535 = vmatprep.subr.mxu0 0.0
        %536 = vmatpush2.msra.mxu0 0.0
        %537 = vmatprep.subr.mxu0 0.0
        %538 = vmatpush2.msra.mxu0 0.0
        %539 = vmatprep.subr.mxu0 0.0
        %540 = vmatpush2.msra.mxu0 0.0
        %541 = vmatprep.subr.mxu0 0.0
        %542 = vmatpush2.msra.mxu0 0.0
        %543 = vmatprep.subr.mxu0 0.0
        %544 = vmatpush2.msra.mxu0 0.0
        %545 = vmatprep.subr.mxu0 0.0
        %546 = vmatpush2.msra.mxu0 0.0
        %547 = vmatprep.subr.mxu0 0.0
        %548 = vmatpush2.msra.mxu0 0.0
        %549 = vmatprep.subr.mxu0 0.0
        %550 = vmatpush2.msra.mxu0 0.0
        %551 = vmatprep.subr.mxu0 0.0
        %552 = vmatpush2.msra.mxu0 0.0
        %553 = vmatprep.mubr.f32.mxu0 0.0
        %554 = vmatmul.mubr.f32.gmra.mxu0 %v462
        %v555 = vpop.f32.mrf.mxu0
        %v556 = vadd.f32 %v458, %v555
        %v557 = vpop.f32.mrf.mxu0
        %558 = vmatprep.mubr.f32.mxu0 0.0
        %559 = vmatmul.mubr.f32.gmra.mxu0 %v465
        %v560 = vpop.f32.mrf.mxu0
        %v561 = vadd.f32 %v458, %v560
        %v562 = vpop.f32.mrf.mxu0
        %563 = vmatprep.mubr.f32.mxu0 0.0
        %564 = vmatmul.mubr.f32.gmra.mxu0 %v468
        %v565 = vpop.f32.mrf.mxu0
        %v566 = vadd.f32 %v458, %v565
        %v567 = vpop.f32.mrf.mxu0
        %568 = vmatprep.mubr.f32.mxu0 0.0
        %569 = vmatmul.mubr.f32.gmra.mxu0 %v471
        %v570 = vpop.f32.mrf.mxu0
        %v571 = vadd.f32 %v458, %v570
        %v572 = vpop.f32.mrf.mxu0
        %573 = vmatprep.mubr.f32.mxu0 0.0
        %574 = vmatmul.mubr.f32.gmra.mxu0 %v474
        %v575 = vpop.f32.mrf.mxu0
        %v576 = vadd.f32 %v458, %v575
        %v577 = vpop.f32.mrf.mxu0
        %578 = vmatprep.mubr.f32.mxu0 0.0
        %579 = vmatmul.mubr.f32.gmra.mxu0 %v477
        %v580 = vpop.f32.mrf.mxu0
        %v581 = vadd.f32 %v458, %v580
        %v582 = vpop.f32.mrf.mxu0
        %583 = vmatprep.mubr.f32.mxu0 0.0
        %584 = vmatmul.mubr.f32.gmra.mxu0 %v480
        %v585 = vpop.f32.mrf.mxu0
        %v586 = vadd.f32 %v458, %v585
        %v587 = vpop.f32.mrf.mxu0
        %588 = vmatprep.mubr.f32.mxu0 0.0
        %589 = vmatmul.mubr.f32.gmra.mxu0 %v483
        %v590 = vpop.f32.mrf.mxu0
        %v591 = vadd.f32 %v458, %v590
        %v592 = vpop.f32.mrf.mxu0
        %593 = vdwg.mxu0
        %v594 = vld [vmem:[%s2] sm:$0xff]
        %v595 = vld [vmem:[%s2 + $0x8] sm:$0xff]
        %v596 = vld [vmem:[%s2 + $0x10] sm:$0xff]
        %v597 = vld [vmem:[%s2 + $0x18] sm:$0xff]
        %v598 = vlaneseq
        %v599 = vand.u32 %v598, 127
        %vm600 = vcmp.ge.s32.totalorder %v599, 64
        %vm601 = vcmp.lt.s32.totalorder %v599, 96
        %vm602 = vmand %vm600, %vm601
        %vm603 = vcmask 261120
        %v605 = vsel %vm603, 0.0, 0
        %607 = vmatprep.subr.mxu0 0.0
        %608 = vmatpush1.msra.mxu0 0.0
        %609 = vmatprep.subr.mxu0 0.0
        %610 = vmatpush1.msra.mxu0 0.0
        %611 = vmatprep.subr.mxu0 0.0
        %612 = vmatpush1.msra.mxu0 0.0
        %613 = vmatprep.subr.mxu0 0.0
        %614 = vmatpush1.msra.mxu0 0.0
        %615 = vmatprep.subr.mxu0 0.0
        %616 = vmatpush1.msra.mxu0 0.0
        %617 = vmatprep.subr.mxu0 0.0
        %618 = vmatpush1.msra.mxu0 0.0
        %619 = vmatprep.subr.mxu0 0.0
        %620 = vmatpush1.msra.mxu0 0.0
        %621 = vmatprep.subr.mxu0 0.0
        %622 = vmatpush1.msra.mxu0 0.0
        %623 = vmatprep.subr.mxu0 0.0
        %624 = vmatpush1.msra.mxu0 0.0
        %625 = vmatprep.subr.mxu0 0.0
        %626 = vmatpush1.msra.mxu0 0.0
        %627 = vmatprep.subr.mxu0 0.0
        %628 = vmatpush1.msra.mxu0 0.0
        %629 = vmatprep.subr.mxu0 0.0
        %630 = vmatpush1.msra.mxu0 0.0
        %631 = vmatprep.subr.mxu0 0.0
        %632 = vmatpush1.msra.mxu0 %v597
        %633 = vmatprep.subr.mxu0 0.0
        %634 = vmatpush1.msra.mxu0 %v596
        %635 = vmatprep.subr.mxu0 0.0
        %636 = vmatpush1.msra.mxu0 %v595
        %637 = vmatprep.subr.mxu0 0.0
        %638 = vmatpush1.msra.mxu0 %v594
        %639 = vmatprep.subr.mxu0 0.0
        %640 = vmatpush2.msra.mxu0 0.0
        %641 = vmatprep.subr.mxu0 0.0
        %642 = vmatpush2.msra.mxu0 0.0
        %643 = vmatprep.subr.mxu0 0.0
        %644 = vmatpush2.msra.mxu0 0.0
        %645 = vmatprep.subr.mxu0 0.0
        %646 = vmatpush2.msra.mxu0 0.0
        %647 = vmatprep.subr.mxu0 0.0
        %648 = vmatpush2.msra.mxu0 0.0
        %649 = vmatprep.subr.mxu0 0.0
        %650 = vmatpush2.msra.mxu0 0.0
        %651 = vmatprep.subr.mxu0 0.0
        %652 = vmatpush2.msra.mxu0 0.0
        %653 = vmatprep.subr.mxu0 0.0
        %654 = vmatpush2.msra.mxu0 0.0
        %655 = vmatprep.subr.mxu0 0.0
        %656 = vmatpush2.msra.mxu0 0.0
        %657 = vmatprep.subr.mxu0 0.0
        %658 = vmatpush2.msra.mxu0 0.0
        %659 = vmatprep.subr.mxu0 0.0
        %660 = vmatpush2.msra.mxu0 0.0
        %661 = vmatprep.subr.mxu0 0.0
        %662 = vmatpush2.msra.mxu0 0.0
        %663 = vmatprep.subr.mxu0 0.0
        %664 = vmatpush2.msra.mxu0 0.0
        %665 = vmatprep.subr.mxu0 0.0
        %666 = vmatpush2.msra.mxu0 0.0
        %667 = vmatprep.subr.mxu0 0.0
        %668 = vmatpush2.msra.mxu0 0.0
        %669 = vmatprep.subr.mxu0 0.0
        %670 = vmatpush2.msra.mxu0 0.0
        %671 = vmatprep.mubr.f32.mxu0 0.0
        %672 = vmatmul.mubr.f32.gmra.mxu0 %v605
        %v673 = vpop.f32.mrf.mxu0
        %v674 = vadd.f32 0.0, %v673
        %v675 = vpop.f32.mrf.mxu0
        %676 = vdwg.mxu0
        %v677 = vadd.f32 %v556, %v674
        %v678 = vxor.u32 %v677, 2147483648
        %v679 = vmul.f32 %v678, 1.442695
        %v680 = vpow.pop %v679
        %v681 = vadd.f32 %v680, 1.0
        %v682 = vrcp.pop %v681
        %v683 = vmul.f32 1.0, %v682
        %v684 = vmul.f32 %v683, 2.0
        %v685 = vsub.f32 %v684, 1.0
        %v686 = vsel %vm602, %v685, %v683
        %v687 = vmul.f32 %v686, 0.0
        %689 = vrot.lane.b32.xlu0 %v686, 64
        %v690 = vpop.permute.xlu0 %689
        %v692 = vmul.f32 %v686, %v690
        %694 = vrot.lane.b32.xlu0 %v692, 32
        %v695 = vpop.permute.xlu0 %694
        %v697 = vadd.f32 %v687, %v695
        %v698 = vtanh.pop %v697
        %700 = vrot.lane.b32.xlu0 %v698, 64
        %v701 = vpop.permute.xlu0 %700
        %v703 = vmul.f32 %v686, %v701
        %705 = vrot.lane.b32.xlu0 %v703, 32
        %v706 = vpop.permute.xlu0 %705
        %v707 = vsel %vm603, %v706, 0
        %709 = vmatprep.subr.mxu0 0.0
        %710 = vmatpush1.msra.mxu0 0.0
        %711 = vmatprep.subr.mxu0 0.0
        %712 = vmatpush1.msra.mxu0 0.0
        %713 = vmatprep.subr.mxu0 0.0
        %714 = vmatpush1.msra.mxu0 0.0
        %715 = vmatprep.subr.mxu0 0.0
        %716 = vmatpush1.msra.mxu0 0.0
        %717 = vmatprep.subr.mxu0 0.0
        %718 = vmatpush1.msra.mxu0 0.0
        %719 = vmatprep.subr.mxu0 0.0
        %720 = vmatpush1.msra.mxu0 0.0
        %721 = vmatprep.subr.mxu0 0.0
        %722 = vmatpush1.msra.mxu0 0.0
        %723 = vmatprep.subr.mxu0 0.0
        %724 = vmatpush1.msra.mxu0 0.0
        %725 = vmatprep.subr.mxu0 0.0
        %726 = vmatpush1.msra.mxu0 0.0
        %727 = vmatprep.subr.mxu0 0.0
        %728 = vmatpush1.msra.mxu0 0.0
        %729 = vmatprep.subr.mxu0 0.0
        %730 = vmatpush1.msra.mxu0 0.0
        %731 = vmatprep.subr.mxu0 0.0
        %732 = vmatpush1.msra.mxu0 0.0
        %733 = vmatprep.subr.mxu0 0.0
        %734 = vmatpush1.msra.mxu0 %v597
        %735 = vmatprep.subr.mxu0 0.0
        %736 = vmatpush1.msra.mxu0 %v596
        %737 = vmatprep.subr.mxu0 0.0
        %738 = vmatpush1.msra.mxu0 %v595
        %739 = vmatprep.subr.mxu0 0.0
        %740 = vmatpush1.msra.mxu0 %v594
        %741 = vmatprep.subr.mxu0 0.0
        %742 = vmatpush2.msra.mxu0 0.0
        %743 = vmatprep.subr.mxu0 0.0
        %744 = vmatpush2.msra.mxu0 0.0
        %745 = vmatprep.subr.mxu0 0.0
        %746 = vmatpush2.msra.mxu0 0.0
        %747 = vmatprep.subr.mxu0 0.0
        %748 = vmatpush2.msra.mxu0 0.0
        %749 = vmatprep.subr.mxu0 0.0
        %750 = vmatpush2.msra.mxu0 0.0
        %751 = vmatprep.subr.mxu0 0.0
        %752 = vmatpush2.msra.mxu0 0.0
        %753 = vmatprep.subr.mxu0 0.0
        %754 = vmatpush2.msra.mxu0 0.0
        %755 = vmatprep.subr.mxu0 0.0
        %756 = vmatpush2.msra.mxu0 0.0
        %757 = vmatprep.subr.mxu0 0.0
        %758 = vmatpush2.msra.mxu0 0.0
        %759 = vmatprep.subr.mxu0 0.0
        %760 = vmatpush2.msra.mxu0 0.0
        %761 = vmatprep.subr.mxu0 0.0
        %762 = vmatpush2.msra.mxu0 0.0
        %763 = vmatprep.subr.mxu0 0.0
        %764 = vmatpush2.msra.mxu0 0.0
        %765 = vmatprep.subr.mxu0 0.0
        %766 = vmatpush2.msra.mxu0 0.0
        %767 = vmatprep.subr.mxu0 0.0
        %768 = vmatpush2.msra.mxu0 0.0
        %769 = vmatprep.subr.mxu0 0.0
        %770 = vmatpush2.msra.mxu0 0.0
        %771 = vmatprep.subr.mxu0 0.0
        %772 = vmatpush2.msra.mxu0 0.0
        %773 = vmatprep.mubr.f32.mxu0 0.0
        %774 = vmatmul.mubr.f32.gmra.mxu0 %v707
        %v775 = vpop.f32.mrf.mxu0
        %v776 = vadd.f32 0.0, %v775
        %v777 = vpop.f32.mrf.mxu0
        %778 = vdwg.mxu0
        %v779 = vadd.f32 %v561, %v776
        %v780 = vxor.u32 %v779, 2147483648
        %v781 = vmul.f32 %v780, 1.442695
        %v782 = vpow.pop %v781
        %v783 = vadd.f32 %v782, 1.0
        %v784 = vrcp.pop %v783
        %v785 = vmul.f32 1.0, %v784
        %v786 = vmul.f32 %v785, 2.0
        %v787 = vsub.f32 %v786, 1.0
        %v788 = vsel %vm602, %v787, %v785
        %v789 = vmul.f32 %v788, %v697
        %791 = vrot.lane.b32.xlu0 %v788, 64
        %v792 = vpop.permute.xlu0 %791
        %v794 = vmul.f32 %v788, %v792
        %796 = vrot.lane.b32.xlu0 %v794, 32
        %v797 = vpop.permute.xlu0 %796
        %v799 = vadd.f32 %v789, %v797
        %v800 = vtanh.pop %v799
        %802 = vrot.lane.b32.xlu0 %v800, 64
        %v803 = vpop.permute.xlu0 %802
        %v805 = vmul.f32 %v788, %v803
        %807 = vrot.lane.b32.xlu0 %v805, 32
        %v808 = vpop.permute.xlu0 %807
        %v809 = vsel %vm603, %v808, 0
        %811 = vmatprep.subr.mxu0 0.0
        %812 = vmatpush1.msra.mxu0 0.0
        %813 = vmatprep.subr.mxu0 0.0
        %814 = vmatpush1.msra.mxu0 0.0
        %815 = vmatprep.subr.mxu0 0.0
        %816 = vmatpush1.msra.mxu0 0.0
        %817 = vmatprep.subr.mxu0 0.0
        %818 = vmatpush1.msra.mxu0 0.0
        %819 = vmatprep.subr.mxu0 0.0
        %820 = vmatpush1.msra.mxu0 0.0
        %821 = vmatprep.subr.mxu0 0.0
        %822 = vmatpush1.msra.mxu0 0.0
        %823 = vmatprep.subr.mxu0 0.0
        %824 = vmatpush1.msra.mxu0 0.0
        %825 = vmatprep.subr.mxu0 0.0
        %826 = vmatpush1.msra.mxu0 0.0
        %827 = vmatprep.subr.mxu0 0.0
        %828 = vmatpush1.msra.mxu0 0.0
        %829 = vmatprep.subr.mxu0 0.0
        %830 = vmatpush1.msra.mxu0 0.0
        %831 = vmatprep.subr.mxu0 0.0
        %832 = vmatpush1.msra.mxu0 0.0
        %833 = vmatprep.subr.mxu0 0.0
        %834 = vmatpush1.msra.mxu0 0.0
        %835 = vmatprep.subr.mxu0 0.0
        %836 = vmatpush1.msra.mxu0 %v597
        %837 = vmatprep.subr.mxu0 0.0
        %838 = vmatpush1.msra.mxu0 %v596
        %839 = vmatprep.subr.mxu0 0.0
        %840 = vmatpush1.msra.mxu0 %v595
        %841 = vmatprep.subr.mxu0 0.0
        %842 = vmatpush1.msra.mxu0 %v594
        %843 = vmatprep.subr.mxu0 0.0
        %844 = vmatpush2.msra.mxu0 0.0
        %845 = vmatprep.subr.mxu0 0.0
        %846 = vmatpush2.msra.mxu0 0.0
        %847 = vmatprep.subr.mxu0 0.0
        %848 = vmatpush2.msra.mxu0 0.0
        %849 = vmatprep.subr.mxu0 0.0
        %850 = vmatpush2.msra.mxu0 0.0
        %851 = vmatprep.subr.mxu0 0.0
        %852 = vmatpush2.msra.mxu0 0.0
        %853 = vmatprep.subr.mxu0 0.0
        %854 = vmatpush2.msra.mxu0 0.0
        %855 = vmatprep.subr.mxu0 0.0
        %856 = vmatpush2.msra.mxu0 0.0
        %857 = vmatprep.subr.mxu0 0.0
        %858 = vmatpush2.msra.mxu0 0.0
        %859 = vmatprep.subr.mxu0 0.0
        %860 = vmatpush2.msra.mxu0 0.0
        %861 = vmatprep.subr.mxu0 0.0
        %862 = vmatpush2.msra.mxu0 0.0
        %863 = vmatprep.subr.mxu0 0.0
        %864 = vmatpush2.msra.mxu0 0.0
        %865 = vmatprep.subr.mxu0 0.0
        %866 = vmatpush2.msra.mxu0 0.0
        %867 = vmatprep.subr.mxu0 0.0
        %868 = vmatpush2.msra.mxu0 0.0
        %869 = vmatprep.subr.mxu0 0.0
        %870 = vmatpush2.msra.mxu0 0.0
        %871 = vmatprep.subr.mxu0 0.0
        %872 = vmatpush2.msra.mxu0 0.0
        %873 = vmatprep.subr.mxu0 0.0
        %874 = vmatpush2.msra.mxu0 0.0
        %875 = vmatprep.mubr.f32.mxu0 0.0
        %876 = vmatmul.mubr.f32.gmra.mxu0 %v809
        %v877 = vpop.f32.mrf.mxu0
        %v878 = vadd.f32 0.0, %v877
        %v879 = vpop.f32.mrf.mxu0
        %880 = vdwg.mxu0
        %v881 = vadd.f32 %v566, %v878
        %v882 = vxor.u32 %v881, 2147483648
        %v883 = vmul.f32 %v882, 1.442695
        %v884 = vpow.pop %v883
        %v885 = vadd.f32 %v884, 1.0
        %v886 = vrcp.pop %v885
        %v887 = vmul.f32 1.0, %v886
        %v888 = vmul.f32 %v887, 2.0
        %v889 = vsub.f32 %v888, 1.0
        %v890 = vsel %vm602, %v889, %v887
        %v891 = vmul.f32 %v890, %v799
        %893 = vrot.lane.b32.xlu0 %v890, 64
        %v894 = vpop.permute.xlu0 %893
        %v896 = vmul.f32 %v890, %v894
        %898 = vrot.lane.b32.xlu0 %v896, 32
        %v899 = vpop.permute.xlu0 %898
        %v901 = vadd.f32 %v891, %v899
        %v902 = vtanh.pop %v901
        %904 = vrot.lane.b32.xlu0 %v902, 64
        %v905 = vpop.permute.xlu0 %904
        %v907 = vmul.f32 %v890, %v905
        %909 = vrot.lane.b32.xlu0 %v907, 32
        %v910 = vpop.permute.xlu0 %909
        %v911 = vsel %vm603, %v910, 0
        %913 = vmatprep.subr.mxu0 0.0
        %914 = vmatpush1.msra.mxu0 0.0
        %915 = vmatprep.subr.mxu0 0.0
        %916 = vmatpush1.msra.mxu0 0.0
        %917 = vmatprep.subr.mxu0 0.0
        %918 = vmatpush1.msra.mxu0 0.0
        %919 = vmatprep.subr.mxu0 0.0
        %920 = vmatpush1.msra.mxu0 0.0
        %921 = vmatprep.subr.mxu0 0.0
        %922 = vmatpush1.msra.mxu0 0.0
        %923 = vmatprep.subr.mxu0 0.0
        %924 = vmatpush1.msra.mxu0 0.0
        %925 = vmatprep.subr.mxu0 0.0
        %926 = vmatpush1.msra.mxu0 0.0
        %927 = vmatprep.subr.mxu0 0.0
        %928 = vmatpush1.msra.mxu0 0.0
        %929 = vmatprep.subr.mxu0 0.0
        %930 = vmatpush1.msra.mxu0 0.0
        %931 = vmatprep.subr.mxu0 0.0
        %932 = vmatpush1.msra.mxu0 0.0
        %933 = vmatprep.subr.mxu0 0.0
        %934 = vmatpush1.msra.mxu0 0.0
        %935 = vmatprep.subr.mxu0 0.0
        %936 = vmatpush1.msra.mxu0 0.0
        %937 = vmatprep.subr.mxu0 0.0
        %938 = vmatpush1.msra.mxu0 %v597
        %939 = vmatprep.subr.mxu0 0.0
        %940 = vmatpush1.msra.mxu0 %v596
        %941 = vmatprep.subr.mxu0 0.0
        %942 = vmatpush1.msra.mxu0 %v595
        %943 = vmatprep.subr.mxu0 0.0
        %944 = vmatpush1.msra.mxu0 %v594
        %945 = vmatprep.subr.mxu0 0.0
        %946 = vmatpush2.msra.mxu0 0.0
        %947 = vmatprep.subr.mxu0 0.0
        %948 = vmatpush2.msra.mxu0 0.0
        %949 = vmatprep.subr.mxu0 0.0
        %950 = vmatpush2.msra.mxu0 0.0
        %951 = vmatprep.subr.mxu0 0.0
        %952 = vmatpush2.msra.mxu0 0.0
        %953 = vmatprep.subr.mxu0 0.0
        %954 = vmatpush2.msra.mxu0 0.0
        %955 = vmatprep.subr.mxu0 0.0
        %956 = vmatpush2.msra.mxu0 0.0
        %957 = vmatprep.subr.mxu0 0.0
        %958 = vmatpush2.msra.mxu0 0.0
        %959 = vmatprep.subr.mxu0 0.0
        %960 = vmatpush2.msra.mxu0 0.0
        %961 = vmatprep.subr.mxu0 0.0
        %962 = vmatpush2.msra.mxu0 0.0
        %963 = vmatprep.subr.mxu0 0.0
        %964 = vmatpush2.msra.mxu0 0.0
        %965 = vmatprep.subr.mxu0 0.0
        %966 = vmatpush2.msra.mxu0 0.0
        %967 = vmatprep.subr.mxu0 0.0
        %968 = vmatpush2.msra.mxu0 0.0
        %969 = vmatprep.subr.mxu0 0.0
        %970 = vmatpush2.msra.mxu0 0.0
        %971 = vmatprep.subr.mxu0 0.0
        %972 = vmatpush2.msra.mxu0 0.0
        %973 = vmatprep.subr.mxu0 0.0
        %974 = vmatpush2.msra.mxu0 0.0
        %975 = vmatprep.subr.mxu0 0.0
        %976 = vmatpush2.msra.mxu0 0.0
        %977 = vmatprep.mubr.f32.mxu0 0.0
        %978 = vmatmul.mubr.f32.gmra.mxu0 %v911
        %v979 = vpop.f32.mrf.mxu0
        %v980 = vadd.f32 0.0, %v979
        %v981 = vpop.f32.mrf.mxu0
        %982 = vdwg.mxu0
        %v983 = vadd.f32 %v571, %v980
        %v984 = vxor.u32 %v983, 2147483648
        %v985 = vmul.f32 %v984, 1.442695
        %v986 = vpow.pop %v985
        %v987 = vadd.f32 %v986, 1.0
        %v988 = vrcp.pop %v987
        %v989 = vmul.f32 1.0, %v988
        %v990 = vmul.f32 %v989, 2.0
        %v991 = vsub.f32 %v990, 1.0
        %v992 = vsel %vm602, %v991, %v989
        %v993 = vmul.f32 %v992, %v901
        %995 = vrot.lane.b32.xlu0 %v992, 64
        %v996 = vpop.permute.xlu0 %995
        %v998 = vmul.f32 %v992, %v996
        %1000 = vrot.lane.b32.xlu0 %v998, 32
        %v1001 = vpop.permute.xlu0 %1000
        %v1003 = vadd.f32 %v993, %v1001
        %v1004 = vtanh.pop %v1003
        %1006 = vrot.lane.b32.xlu0 %v1004, 64
        %v1007 = vpop.permute.xlu0 %1006
        %v1009 = vmul.f32 %v992, %v1007
        %1011 = vrot.lane.b32.xlu0 %v1009, 32
        %v1012 = vpop.permute.xlu0 %1011
        %v1013 = vsel %vm603, %v1012, 0
        %1015 = vmatprep.subr.mxu0 0.0
        %1016 = vmatpush1.msra.mxu0 0.0
        %1017 = vmatprep.subr.mxu0 0.0
        %1018 = vmatpush1.msra.mxu0 0.0
        %1019 = vmatprep.subr.mxu0 0.0
        %1020 = vmatpush1.msra.mxu0 0.0
        %1021 = vmatprep.subr.mxu0 0.0
        %1022 = vmatpush1.msra.mxu0 0.0
        %1023 = vmatprep.subr.mxu0 0.0
        %1024 = vmatpush1.msra.mxu0 0.0
        %1025 = vmatprep.subr.mxu0 0.0
        %1026 = vmatpush1.msra.mxu0 0.0
        %1027 = vmatprep.subr.mxu0 0.0
        %1028 = vmatpush1.msra.mxu0 0.0
        %1029 = vmatprep.subr.mxu0 0.0
        %1030 = vmatpush1.msra.mxu0 0.0
        %1031 = vmatprep.subr.mxu0 0.0
        %1032 = vmatpush1.msra.mxu0 0.0
        %1033 = vmatprep.subr.mxu0 0.0
        %1034 = vmatpush1.msra.mxu0 0.0
        %1035 = vmatprep.subr.mxu0 0.0
        %1036 = vmatpush1.msra.mxu0 0.0
        %1037 = vmatprep.subr.mxu0 0.0
        %1038 = vmatpush1.msra.mxu0 0.0
        %1039 = vmatprep.subr.mxu0 0.0
        %1040 = vmatpush1.msra.mxu0 %v597
        %1041 = vmatprep.subr.mxu0 0.0
        %1042 = vmatpush1.msra.mxu0 %v596
        %1043 = vmatprep.subr.mxu0 0.0
        %1044 = vmatpush1.msra.mxu0 %v595
        %1045 = vmatprep.subr.mxu0 0.0
        %1046 = vmatpush1.msra.mxu0 %v594
        %1047 = vmatprep.subr.mxu0 0.0
        %1048 = vmatpush2.msra.mxu0 0.0
        %1049 = vmatprep.subr.mxu0 0.0
        %1050 = vmatpush2.msra.mxu0 0.0
        %1051 = vmatprep.subr.mxu0 0.0
        %1052 = vmatpush2.msra.mxu0 0.0
        %1053 = vmatprep.subr.mxu0 0.0
        %1054 = vmatpush2.msra.mxu0 0.0
        %1055 = vmatprep.subr.mxu0 0.0
        %1056 = vmatpush2.msra.mxu0 0.0
        %1057 = vmatprep.subr.mxu0 0.0
        %1058 = vmatpush2.msra.mxu0 0.0
        %1059 = vmatprep.subr.mxu0 0.0
        %1060 = vmatpush2.msra.mxu0 0.0
        %1061 = vmatprep.subr.mxu0 0.0
        %1062 = vmatpush2.msra.mxu0 0.0
        %1063 = vmatprep.subr.mxu0 0.0
        %1064 = vmatpush2.msra.mxu0 0.0
        %1065 = vmatprep.subr.mxu0 0.0
        %1066 = vmatpush2.msra.mxu0 0.0
        %1067 = vmatprep.subr.mxu0 0.0
        %1068 = vmatpush2.msra.mxu0 0.0
        %1069 = vmatprep.subr.mxu0 0.0
        %1070 = vmatpush2.msra.mxu0 0.0
        %1071 = vmatprep.subr.mxu0 0.0
        %1072 = vmatpush2.msra.mxu0 0.0
        %1073 = vmatprep.subr.mxu0 0.0
        %1074 = vmatpush2.msra.mxu0 0.0
        %1075 = vmatprep.subr.mxu0 0.0
        %1076 = vmatpush2.msra.mxu0 0.0
        %1077 = vmatprep.subr.mxu0 0.0
        %1078 = vmatpush2.msra.mxu0 0.0
        %1079 = vmatprep.mubr.f32.mxu0 0.0
        %1080 = vmatmul.mubr.f32.gmra.mxu0 %v1013
        %v1081 = vpop.f32.mrf.mxu0
        %v1082 = vadd.f32 0.0, %v1081
        %v1083 = vpop.f32.mrf.mxu0
        %1084 = vdwg.mxu0
        %v1085 = vadd.f32 %v576, %v1082
        %v1086 = vxor.u32 %v1085, 2147483648
        %v1087 = vmul.f32 %v1086, 1.442695
        %v1088 = vpow.pop %v1087
        %v1089 = vadd.f32 %v1088, 1.0
        %v1090 = vrcp.pop %v1089
        %v1091 = vmul.f32 1.0, %v1090
        %v1092 = vmul.f32 %v1091, 2.0
        %v1093 = vsub.f32 %v1092, 1.0
        %v1094 = vsel %vm602, %v1093, %v1091
        %v1095 = vmul.f32 %v1094, %v1003
        %1097 = vrot.lane.b32.xlu0 %v1094, 64
        %v1098 = vpop.permute.xlu0 %1097
        %v1100 = vmul.f32 %v1094, %v1098
        %1102 = vrot.lane.b32.xlu0 %v1100, 32
        %v1103 = vpop.permute.xlu0 %1102
        %v1105 = vadd.f32 %v1095, %v1103
        %v1106 = vtanh.pop %v1105
        %1108 = vrot.lane.b32.xlu0 %v1106, 64
        %v1109 = vpop.permute.xlu0 %1108
        %v1111 = vmul.f32 %v1094, %v1109
        %1113 = vrot.lane.b32.xlu0 %v1111, 32
        %v1114 = vpop.permute.xlu0 %1113
        %v1115 = vsel %vm603, %v1114, 0
        %1117 = vmatprep.subr.mxu0 0.0
        %1118 = vmatpush1.msra.mxu0 0.0
        %1119 = vmatprep.subr.mxu0 0.0
        %1120 = vmatpush1.msra.mxu0 0.0
        %1121 = vmatprep.subr.mxu0 0.0
        %1122 = vmatpush1.msra.mxu0 0.0
        %1123 = vmatprep.subr.mxu0 0.0
        %1124 = vmatpush1.msra.mxu0 0.0
        %1125 = vmatprep.subr.mxu0 0.0
        %1126 = vmatpush1.msra.mxu0 0.0
        %1127 = vmatprep.subr.mxu0 0.0
        %1128 = vmatpush1.msra.mxu0 0.0
        %1129 = vmatprep.subr.mxu0 0.0
        %1130 = vmatpush1.msra.mxu0 0.0
        %1131 = vmatprep.subr.mxu0 0.0
        %1132 = vmatpush1.msra.mxu0 0.0
        %1133 = vmatprep.subr.mxu0 0.0
        %1134 = vmatpush1.msra.mxu0 0.0
        %1135 = vmatprep.subr.mxu0 0.0
        %1136 = vmatpush1.msra.mxu0 0.0
        %1137 = vmatprep.subr.mxu0 0.0
        %1138 = vmatpush1.msra.mxu0 0.0
        %1139 = vmatprep.subr.mxu0 0.0
        %1140 = vmatpush1.msra.mxu0 0.0
        %1141 = vmatprep.subr.mxu0 0.0
        %1142 = vmatpush1.msra.mxu0 %v597
        %1143 = vmatprep.subr.mxu0 0.0
        %1144 = vmatpush1.msra.mxu0 %v596
        %1145 = vmatprep.subr.mxu0 0.0
        %1146 = vmatpush1.msra.mxu0 %v595
        %1147 = vmatprep.subr.mxu0 0.0
        %1148 = vmatpush1.msra.mxu0 %v594
        %1149 = vmatprep.subr.mxu0 0.0
        %1150 = vmatpush2.msra.mxu0 0.0
        %1151 = vmatprep.subr.mxu0 0.0
        %1152 = vmatpush2.msra.mxu0 0.0
        %1153 = vmatprep.subr.mxu0 0.0
        %1154 = vmatpush2.msra.mxu0 0.0
        %1155 = vmatprep.subr.mxu0 0.0
        %1156 = vmatpush2.msra.mxu0 0.0
        %1157 = vmatprep.subr.mxu0 0.0
        %1158 = vmatpush2.msra.mxu0 0.0
        %1159 = vmatprep.subr.mxu0 0.0
        %1160 = vmatpush2.msra.mxu0 0.0
        %1161 = vmatprep.subr.mxu0 0.0
        %1162 = vmatpush2.msra.mxu0 0.0
        %1163 = vmatprep.subr.mxu0 0.0
        %1164 = vmatpush2.msra.mxu0 0.0
        %1165 = vmatprep.subr.mxu0 0.0
        %1166 = vmatpush2.msra.mxu0 0.0
        %1167 = vmatprep.subr.mxu0 0.0
        %1168 = vmatpush2.msra.mxu0 0.0
        %1169 = vmatprep.subr.mxu0 0.0
        %1170 = vmatpush2.msra.mxu0 0.0
        %1171 = vmatprep.subr.mxu0 0.0
        %1172 = vmatpush2.msra.mxu0 0.0
        %1173 = vmatprep.subr.mxu0 0.0
        %1174 = vmatpush2.msra.mxu0 0.0
        %1175 = vmatprep.subr.mxu0 0.0
        %1176 = vmatpush2.msra.mxu0 0.0
        %1177 = vmatprep.subr.mxu0 0.0
        %1178 = vmatpush2.msra.mxu0 0.0
        %1179 = vmatprep.subr.mxu0 0.0
        %1180 = vmatpush2.msra.mxu0 0.0
        %1181 = vmatprep.mubr.f32.mxu0 0.0
        %1182 = vmatmul.mubr.f32.gmra.mxu0 %v1115
        %v1183 = vpop.f32.mrf.mxu0
        %v1184 = vadd.f32 0.0, %v1183
        %v1185 = vpop.f32.mrf.mxu0
        %1186 = vdwg.mxu0
        %v1187 = vadd.f32 %v581, %v1184
        %v1188 = vxor.u32 %v1187, 2147483648
        %v1189 = vmul.f32 %v1188, 1.442695
        %v1190 = vpow.pop %v1189
        %v1191 = vadd.f32 %v1190, 1.0
        %v1192 = vrcp.pop %v1191
        %v1193 = vmul.f32 1.0, %v1192
        %v1194 = vmul.f32 %v1193, 2.0
        %v1195 = vsub.f32 %v1194, 1.0
        %v1196 = vsel %vm602, %v1195, %v1193
        %v1197 = vmul.f32 %v1196, %v1105
        %1199 = vrot.lane.b32.xlu0 %v1196, 64
        %v1200 = vpop.permute.xlu0 %1199
        %v1202 = vmul.f32 %v1196, %v1200
        %1204 = vrot.lane.b32.xlu0 %v1202, 32
        %v1205 = vpop.permute.xlu0 %1204
        %v1207 = vadd.f32 %v1197, %v1205
        %v1208 = vtanh.pop %v1207
        %1210 = vrot.lane.b32.xlu0 %v1208, 64
        %v1211 = vpop.permute.xlu0 %1210
        %v1213 = vmul.f32 %v1196, %v1211
        %1215 = vrot.lane.b32.xlu0 %v1213, 32
        %v1216 = vpop.permute.xlu0 %1215
        %v1217 = vsel %vm603, %v1216, 0
        %1219 = vmatprep.subr.mxu0 0.0
        %1220 = vmatpush1.msra.mxu0 0.0
        %1221 = vmatprep.subr.mxu0 0.0
        %1222 = vmatpush1.msra.mxu0 0.0
        %1223 = vmatprep.subr.mxu0 0.0
        %1224 = vmatpush1.msra.mxu0 0.0
        %1225 = vmatprep.subr.mxu0 0.0
        %1226 = vmatpush1.msra.mxu0 0.0
        %1227 = vmatprep.subr.mxu0 0.0
        %1228 = vmatpush1.msra.mxu0 0.0
        %1229 = vmatprep.subr.mxu0 0.0
        %1230 = vmatpush1.msra.mxu0 0.0
        %1231 = vmatprep.subr.mxu0 0.0
        %1232 = vmatpush1.msra.mxu0 0.0
        %1233 = vmatprep.subr.mxu0 0.0
        %1234 = vmatpush1.msra.mxu0 0.0
        %1235 = vmatprep.subr.mxu0 0.0
        %1236 = vmatpush1.msra.mxu0 0.0
        %1237 = vmatprep.subr.mxu0 0.0
        %1238 = vmatpush1.msra.mxu0 0.0
        %1239 = vmatprep.subr.mxu0 0.0
        %1240 = vmatpush1.msra.mxu0 0.0
        %1241 = vmatprep.subr.mxu0 0.0
        %1242 = vmatpush1.msra.mxu0 0.0
        %1243 = vmatprep.subr.mxu0 0.0
        %1244 = vmatpush1.msra.mxu0 %v597
        %1245 = vmatprep.subr.mxu0 0.0
        %1246 = vmatpush1.msra.mxu0 %v596
        %1247 = vmatprep.subr.mxu0 0.0
        %1248 = vmatpush1.msra.mxu0 %v595
        %1249 = vmatprep.subr.mxu0 0.0
        %1250 = vmatpush1.msra.mxu0 %v594
        %1251 = vmatprep.subr.mxu0 0.0
        %1252 = vmatpush2.msra.mxu0 0.0
        %1253 = vmatprep.subr.mxu0 0.0
        %1254 = vmatpush2.msra.mxu0 0.0
        %1255 = vmatprep.subr.mxu0 0.0
        %1256 = vmatpush2.msra.mxu0 0.0
        %1257 = vmatprep.subr.mxu0 0.0
        %1258 = vmatpush2.msra.mxu0 0.0
        %1259 = vmatprep.subr.mxu0 0.0
        %1260 = vmatpush2.msra.mxu0 0.0
        %1261 = vmatprep.subr.mxu0 0.0
        %1262 = vmatpush2.msra.mxu0 0.0
        %1263 = vmatprep.subr.mxu0 0.0
        %1264 = vmatpush2.msra.mxu0 0.0
        %1265 = vmatprep.subr.mxu0 0.0
        %1266 = vmatpush2.msra.mxu0 0.0
        %1267 = vmatprep.subr.mxu0 0.0
        %1268 = vmatpush2.msra.mxu0 0.0
        %1269 = vmatprep.subr.mxu0 0.0
        %1270 = vmatpush2.msra.mxu0 0.0
        %1271 = vmatprep.subr.mxu0 0.0
        %1272 = vmatpush2.msra.mxu0 0.0
        %1273 = vmatprep.subr.mxu0 0.0
        %1274 = vmatpush2.msra.mxu0 0.0
        %1275 = vmatprep.subr.mxu0 0.0
        %1276 = vmatpush2.msra.mxu0 0.0
        %1277 = vmatprep.subr.mxu0 0.0
        %1278 = vmatpush2.msra.mxu0 0.0
        %1279 = vmatprep.subr.mxu0 0.0
        %1280 = vmatpush2.msra.mxu0 0.0
        %1281 = vmatprep.subr.mxu0 0.0
        %1282 = vmatpush2.msra.mxu0 0.0
        %1283 = vmatprep.mubr.f32.mxu0 0.0
        %1284 = vmatmul.mubr.f32.gmra.mxu0 %v1217
        %v1285 = vpop.f32.mrf.mxu0
        %v1286 = vadd.f32 0.0, %v1285
        %v1287 = vpop.f32.mrf.mxu0
        %1288 = vdwg.mxu0
        %v1289 = vadd.f32 %v586, %v1286
        %v1290 = vxor.u32 %v1289, 2147483648
        %v1291 = vmul.f32 %v1290, 1.442695
        %v1292 = vpow.pop %v1291
        %v1293 = vadd.f32 %v1292, 1.0
        %v1294 = vrcp.pop %v1293
        %v1295 = vmul.f32 1.0, %v1294
        %v1296 = vmul.f32 %v1295, 2.0
        %v1297 = vsub.f32 %v1296, 1.0
        %v1298 = vsel %vm602, %v1297, %v1295
        %v1299 = vmul.f32 %v1298, %v1207
        %1301 = vrot.lane.b32.xlu0 %v1298, 64
        %v1302 = vpop.permute.xlu0 %1301
        %v1304 = vmul.f32 %v1298, %v1302
        %1306 = vrot.lane.b32.xlu0 %v1304, 32
        %v1307 = vpop.permute.xlu0 %1306
        %v1309 = vadd.f32 %v1299, %v1307
        %v1310 = vtanh.pop %v1309
        %1312 = vrot.lane.b32.xlu0 %v1310, 64
        %v1313 = vpop.permute.xlu0 %1312
        %v1315 = vmul.f32 %v1298, %v1313
        %1317 = vrot.lane.b32.xlu0 %v1315, 32
        %v1318 = vpop.permute.xlu0 %1317
        %v1319 = vsel %vm603, %v1318, 0
        %1321 = vmatprep.subr.mxu0 0.0
        %1322 = vmatpush1.msra.mxu0 0.0
        %1323 = vmatprep.subr.mxu0 0.0
        %1324 = vmatpush1.msra.mxu0 0.0
        %1325 = vmatprep.subr.mxu0 0.0
        %1326 = vmatpush1.msra.mxu0 0.0
        %1327 = vmatprep.subr.mxu0 0.0
        %1328 = vmatpush1.msra.mxu0 0.0
        %1329 = vmatprep.subr.mxu0 0.0
        %1330 = vmatpush1.msra.mxu0 0.0
        %1331 = vmatprep.subr.mxu0 0.0
        %1332 = vmatpush1.msra.mxu0 0.0
        %1333 = vmatprep.subr.mxu0 0.0
        %1334 = vmatpush1.msra.mxu0 0.0
        %1335 = vmatprep.subr.mxu0 0.0
        %1336 = vmatpush1.msra.mxu0 0.0
        %1337 = vmatprep.subr.mxu0 0.0
        %1338 = vmatpush1.msra.mxu0 0.0
        %1339 = vmatprep.subr.mxu0 0.0
        %1340 = vmatpush1.msra.mxu0 0.0
        %1341 = vmatprep.subr.mxu0 0.0
        %1342 = vmatpush1.msra.mxu0 0.0
        %1343 = vmatprep.subr.mxu0 0.0
        %1344 = vmatpush1.msra.mxu0 0.0
        %1345 = vmatprep.subr.mxu0 0.0
        %1346 = vmatpush1.msra.mxu0 %v597
        %1347 = vmatprep.subr.mxu0 0.0
        %1348 = vmatpush1.msra.mxu0 %v596
        %1349 = vmatprep.subr.mxu0 0.0
        %1350 = vmatpush1.msra.mxu0 %v595
        %1351 = vmatprep.subr.mxu0 0.0
        %1352 = vmatpush1.msra.mxu0 %v594
        %1353 = vmatprep.subr.mxu0 0.0
        %1354 = vmatpush2.msra.mxu0 0.0
        %1355 = vmatprep.subr.mxu0 0.0
        %1356 = vmatpush2.msra.mxu0 0.0
        %1357 = vmatprep.subr.mxu0 0.0
        %1358 = vmatpush2.msra.mxu0 0.0
        %1359 = vmatprep.subr.mxu0 0.0
        %1360 = vmatpush2.msra.mxu0 0.0
        %1361 = vmatprep.subr.mxu0 0.0
        %1362 = vmatpush2.msra.mxu0 0.0
        %1363 = vmatprep.subr.mxu0 0.0
        %1364 = vmatpush2.msra.mxu0 0.0
        %1365 = vmatprep.subr.mxu0 0.0
        %1366 = vmatpush2.msra.mxu0 0.0
        %1367 = vmatprep.subr.mxu0 0.0
        %1368 = vmatpush2.msra.mxu0 0.0
        %1369 = vmatprep.subr.mxu0 0.0
        %1370 = vmatpush2.msra.mxu0 0.0
        %1371 = vmatprep.subr.mxu0 0.0
        %1372 = vmatpush2.msra.mxu0 0.0
        %1373 = vmatprep.subr.mxu0 0.0
        %1374 = vmatpush2.msra.mxu0 0.0
        %1375 = vmatprep.subr.mxu0 0.0
        %1376 = vmatpush2.msra.mxu0 0.0
        %1377 = vmatprep.subr.mxu0 0.0
        %1378 = vmatpush2.msra.mxu0 0.0
        %1379 = vmatprep.subr.mxu0 0.0
        %1380 = vmatpush2.msra.mxu0 0.0
        %1381 = vmatprep.subr.mxu0 0.0
        %1382 = vmatpush2.msra.mxu0 0.0
        %1383 = vmatprep.subr.mxu0 0.0
        %1384 = vmatpush2.msra.mxu0 0.0
        %1385 = vmatprep.mubr.f32.mxu0 0.0
        %1386 = vmatmul.mubr.f32.gmra.mxu0 %v1319
        %v1387 = vpop.f32.mrf.mxu0
        %v1388 = vadd.f32 0.0, %v1387
        %v1389 = vpop.f32.mrf.mxu0
        %1390 = vdwg.mxu0
        %v1391 = vadd.f32 %v591, %v1388
        %v1392 = vxor.u32 %v1391, 2147483648
        %v1393 = vmul.f32 %v1392, 1.442695
        %v1394 = vpow.pop %v1393
        %v1395 = vadd.f32 %v1394, 1.0
        %v1396 = vrcp.pop %v1395
        %v1397 = vmul.f32 1.0, %v1396
        %v1398 = vmul.f32 %v1397, 2.0
        %v1399 = vsub.f32 %v1398, 1.0
        %v1400 = vsel %vm602, %v1399, %v1397
        %v1401 = vmul.f32 %v1400, %v1309
        %1403 = vrot.lane.b32.xlu0 %v1400, 64
        %v1404 = vpop.permute.xlu0 %1403
        %v1406 = vmul.f32 %v1400, %v1404
        %1408 = vrot.lane.b32.xlu0 %v1406, 32
        %v1409 = vpop.permute.xlu0 %1408
        %v1411 = vadd.f32 %v1401, %v1409
        %v1412 = vtanh.pop %v1411
        %1414 = vrot.lane.b32.xlu0 %v1412, 64
        %v1415 = vpop.permute.xlu0 %1414
        %v1417 = vmul.f32 %v1400, %v1415
        %v1418 = vld [vmem:[%s4] sm:$0xff]
        %v1419 = vld [vmem:[%s4 + $0x8] sm:$0xff]
        %v1420 = vld [vmem:[%s4 + $0x10] sm:$0xff]
        %v1421 = vld [vmem:[%s4 + $0x18] sm:$0xff]
        %v1422 = vld [vmem:[%s5] sm:$0x1]
        %v1424 = vlaneseq
        %v1425 = vshrl.u32 %v1424, 7
        %v1426 = vsub.s32 0, %v1425
        %v1427 = vrot.slane %v1422, %v1426
        %1430 = vrot.lane.b32.xlu0 %v1417, 32
        %v1431 = vpop.permute.xlu0 %1430
        %v1432 = vsel %vm603, %v1431, 0
        %1434 = vmatprep.subr.mxu0 0.0
        %1435 = vmatpush1.msra.mxu0 0.0
        %1436 = vmatprep.subr.mxu0 0.0
        %1437 = vmatpush1.msra.mxu0 0.0
        %1438 = vmatprep.subr.mxu0 0.0
        %1439 = vmatpush1.msra.mxu0 0.0
        %1440 = vmatprep.subr.mxu0 0.0
        %1441 = vmatpush1.msra.mxu0 0.0
        %1442 = vmatprep.subr.mxu0 0.0
        %1443 = vmatpush1.msra.mxu0 0.0
        %1444 = vmatprep.subr.mxu0 0.0
        %1445 = vmatpush1.msra.mxu0 0.0
        %1446 = vmatprep.subr.mxu0 0.0
        %1447 = vmatpush1.msra.mxu0 0.0
        %1448 = vmatprep.subr.mxu0 0.0
        %1449 = vmatpush1.msra.mxu0 0.0
        %1450 = vmatprep.subr.mxu0 0.0
        %1451 = vmatpush1.msra.mxu0 0.0
        %1452 = vmatprep.subr.mxu0 0.0
        %1453 = vmatpush1.msra.mxu0 0.0
        %1454 = vmatprep.subr.mxu0 0.0
        %1455 = vmatpush1.msra.mxu0 0.0
        %1456 = vmatprep.subr.mxu0 0.0
        %1457 = vmatpush1.msra.mxu0 0.0
        %1458 = vmatprep.subr.mxu0 0.0
        %1459 = vmatpush1.msra.mxu0 %v1421
        %1460 = vmatprep.subr.mxu0 0.0
        %1461 = vmatpush1.msra.mxu0 %v1420
        %1462 = vmatprep.subr.mxu0 0.0
        %1463 = vmatpush1.msra.mxu0 %v1419
        %1464 = vmatprep.subr.mxu0 0.0
        %1465 = vmatpush1.msra.mxu0 %v1418
        %1466 = vmatprep.subr.mxu0 0.0
        %1467 = vmatpush2.msra.mxu0 0.0
        %1468 = vmatprep.subr.mxu0 0.0
        %1469 = vmatpush2.msra.mxu0 0.0
        %1470 = vmatprep.subr.mxu0 0.0
        %1471 = vmatpush2.msra.mxu0 0.0
        %1472 = vmatprep.subr.mxu0 0.0
        %1473 = vmatpush2.msra.mxu0 0.0
        %1474 = vmatprep.subr.mxu0 0.0
        %1475 = vmatpush2.msra.mxu0 0.0
        %1476 = vmatprep.subr.mxu0 0.0
        %1477 = vmatpush2.msra.mxu0 0.0
        %1478 = vmatprep.subr.mxu0 0.0
        %1479 = vmatpush2.msra.mxu0 0.0
        %1480 = vmatprep.subr.mxu0 0.0
        %1481 = vmatpush2.msra.mxu0 0.0
        %1482 = vmatprep.subr.mxu0 0.0
        %1483 = vmatpush2.msra.mxu0 0.0
        %1484 = vmatprep.subr.mxu0 0.0
        %1485 = vmatpush2.msra.mxu0 0.0
        %1486 = vmatprep.subr.mxu0 0.0
        %1487 = vmatpush2.msra.mxu0 0.0
        %1488 = vmatprep.subr.mxu0 0.0
        %1489 = vmatpush2.msra.mxu0 0.0
        %1490 = vmatprep.subr.mxu0 0.0
        %1491 = vmatpush2.msra.mxu0 0.0
        %1492 = vmatprep.subr.mxu0 0.0
        %1493 = vmatpush2.msra.mxu0 0.0
        %1494 = vmatprep.subr.mxu0 0.0
        %1495 = vmatpush2.msra.mxu0 0.0
        %1496 = vmatprep.subr.mxu0 0.0
        %1497 = vmatpush2.msra.mxu0 0.0
        %1498 = vmatprep.mubr.f32.mxu0 0.0
        %1499 = vmatmul.mubr.f32.gmra.mxu0 %v1432
        %v1500 = vpop.f32.mrf.mxu0
        %v1501 = vadd.f32 %v1427, %v1500
        %v1502 = vpop.f32.mrf.mxu0
        %1503 = vdwg.mxu0
        %v1504 = vmax.f32 %v1501, 0.0
        %v1505 = vld [vmem:[%s6] sm:$0xff]
        %v1506 = vld [vmem:[%s6 + $0x8] sm:$0xff]
        %v1507 = vld [vmem:[%s6 + $0x10] sm:$0xff]
        %v1508 = vld [vmem:[%s6 + $0x18] sm:$0xff]
        %v1509 = vld [vmem:[%s6 + $0x20] sm:$0xff]
        %v1510 = vld [vmem:[%s6 + $0x28] sm:$0xff]
        %v1511 = vld [vmem:[%s6 + $0x30] sm:$0xff]
        %v1512 = vld [vmem:[%s6 + $0x38] sm:$0xff]
        %v1513 = vld [vmem:[%s7] sm:$0x1]
        %v1515 = vlaneseq
        %v1516 = vshrl.u32 %v1515, 7
        %v1517 = vsub.s32 0, %v1516
        %v1518 = vrot.slane %v1513, %v1517
        %vm1520 = vcmask 523264
        %v1522 = vsel %vm1520, %v1504, 0
        %1524 = vmatprep.subr.mxu0 0.0
        %1525 = vmatpush1.msra.mxu0 0.0
        %1526 = vmatprep.subr.mxu0 0.0
        %1527 = vmatpush1.msra.mxu0 0.0
        %1528 = vmatprep.subr.mxu0 0.0
        %1529 = vmatpush1.msra.mxu0 0.0
        %1530 = vmatprep.subr.mxu0 0.0
        %1531 = vmatpush1.msra.mxu0 0.0
        %1532 = vmatprep.subr.mxu0 0.0
        %1533 = vmatpush1.msra.mxu0 0.0
        %1534 = vmatprep.subr.mxu0 0.0
        %1535 = vmatpush1.msra.mxu0 0.0
        %1536 = vmatprep.subr.mxu0 0.0
        %1537 = vmatpush1.msra.mxu0 0.0
        %1538 = vmatprep.subr.mxu0 0.0
        %1539 = vmatpush1.msra.mxu0 0.0
        %1540 = vmatprep.subr.mxu0 0.0
        %1541 = vmatpush1.msra.mxu0 %v1512
        %1542 = vmatprep.subr.mxu0 0.0
        %1543 = vmatpush1.msra.mxu0 %v1511
        %1544 = vmatprep.subr.mxu0 0.0
        %1545 = vmatpush1.msra.mxu0 %v1510
        %1546 = vmatprep.subr.mxu0 0.0
        %1547 = vmatpush1.msra.mxu0 %v1509
        %1548 = vmatprep.subr.mxu0 0.0
        %1549 = vmatpush1.msra.mxu0 %v1508
        %1550 = vmatprep.subr.mxu0 0.0
        %1551 = vmatpush1.msra.mxu0 %v1507
        %1552 = vmatprep.subr.mxu0 0.0
        %1553 = vmatpush1.msra.mxu0 %v1506
        %1554 = vmatprep.subr.mxu0 0.0
        %1555 = vmatpush1.msra.mxu0 %v1505
        %1556 = vmatprep.subr.mxu0 0.0
        %1557 = vmatpush2.msra.mxu0 0.0
        %1558 = vmatprep.subr.mxu0 0.0
        %1559 = vmatpush2.msra.mxu0 0.0
        %1560 = vmatprep.subr.mxu0 0.0
        %1561 = vmatpush2.msra.mxu0 0.0
        %1562 = vmatprep.subr.mxu0 0.0
        %1563 = vmatpush2.msra.mxu0 0.0
        %1564 = vmatprep.subr.mxu0 0.0
        %1565 = vmatpush2.msra.mxu0 0.0
        %1566 = vmatprep.subr.mxu0 0.0
        %1567 = vmatpush2.msra.mxu0 0.0
        %1568 = vmatprep.subr.mxu0 0.0
        %1569 = vmatpush2.msra.mxu0 0.0
        %1570 = vmatprep.subr.mxu0 0.0
        %1571 = vmatpush2.msra.mxu0 0.0
        %1572 = vmatprep.subr.mxu0 0.0
        %1573 = vmatpush2.msra.mxu0 0.0
        %1574 = vmatprep.subr.mxu0 0.0
        %1575 = vmatpush2.msra.mxu0 0.0
        %1576 = vmatprep.subr.mxu0 0.0
        %1577 = vmatpush2.msra.mxu0 0.0
        %1578 = vmatprep.subr.mxu0 0.0
        %1579 = vmatpush2.msra.mxu0 0.0
        %1580 = vmatprep.subr.mxu0 0.0
        %1581 = vmatpush2.msra.mxu0 0.0
        %1582 = vmatprep.subr.mxu0 0.0
        %1583 = vmatpush2.msra.mxu0 0.0
        %1584 = vmatprep.subr.mxu0 0.0
        %1585 = vmatpush2.msra.mxu0 0.0
        %1586 = vmatprep.subr.mxu0 0.0
        %1587 = vmatpush2.msra.mxu0 0.0
        %1588 = vmatprep.mubr.f32.mxu0 0.0
        %1589 = vmatmul.mubr.f32.gmra.mxu0 %v1522
        %v1590 = vpop.f32.mrf.mxu0
        %v1591 = vadd.f32 %v1518, %v1590
        %v1592 = vpop.f32.mrf.mxu0
        %1593 = vdwg.mxu0
        %v1594 = vmax.f32 %v1591, 0.0
        %v1595 = vpack.c.bf16 %v1594, %v1594
        %v1596 = vld [vmem:[%s399] sm:$0xf]
        %v1597 = vld [vmem:[%s399 + $0x4] sm:$0xf]
        %v1598 = vld [vmem:[%s399 + $0x8] sm:$0xf]
        %v1599 = vld [vmem:[%s399 + $0xc] sm:$0xf]
        %v1600 = vld [vmem:[%s399 + $0x10] sm:$0xf]
        %v1601 = vld [vmem:[%s399 + $0x14] sm:$0xf]
        %v1602 = vld [vmem:[%s399 + $0x18] sm:$0xf]
        %v1603 = vld [vmem:[%s399 + $0x1c] sm:$0xf]
        %v1604 = vld [vmem:[%s438] sm:$0x1]
        %v1606 = vlaneseq
        %v1607 = vshrl.u32 %v1606, 7
        %v1608 = vsub.s32 0, %v1607
        %v1609 = vrot.slane %v1604, %v1608
        %v1619 = vunpack.c.l.b16 %v1596
        %v1620 = vunpack.c.l.b16 %v1597
        %v1621 = vunpack.c.l.b16 %v1598
        %v1622 = vunpack.c.l.b16 %v1599
        %v1623 = vunpack.c.l.b16 %v1600
        %v1624 = vunpack.c.l.b16 %v1601
        %v1625 = vunpack.c.l.b16 %v1602
        %v1626 = vunpack.c.l.b16 %v1603
        %v1627 = vpack.c.b16 %v1620, %v1619
        %v1628 = vpack.c.b16 %v1622, %v1621
        %v1629 = vpack.c.b16 %v1624, %v1623
        %v1630 = vpack.c.b16 %v1626, %v1625
        %v1636 = vsel %vm1520, %v1595, 0
        %1638 = vmatprep.subr.bf16.mxu0 0
        %1639 = vmatpush1.bf16.msra.mxu0 0
        %1640 = vmatprep.subr.bf16.mxu0 0
        %1641 = vmatpush1.bf16.msra.mxu0 0
        %1642 = vmatprep.subr.bf16.mxu0 0
        %1643 = vmatpush1.bf16.msra.mxu0 0
        %1644 = vmatprep.subr.bf16.mxu0 0
        %1645 = vmatpush1.bf16.msra.mxu0 0
        %1646 = vmatprep.subr.bf16.mxu0 0
        %1647 = vmatpush1.bf16.msra.mxu0 %v1630
        %1648 = vmatprep.subr.bf16.mxu0 0
        %1649 = vmatpush1.bf16.msra.mxu0 %v1629
        %1650 = vmatprep.subr.bf16.mxu0 0
        %1651 = vmatpush1.bf16.msra.mxu0 %v1628
        %1652 = vmatprep.subr.bf16.mxu0 0
        %1653 = vmatpush1.bf16.msra.mxu0 %v1627
        %1654 = vmatprep.subr.bf16.mxu0 0
        %1655 = vmatpush2.bf16.msra.mxu0 0
        %1656 = vmatprep.subr.bf16.mxu0 0
        %1657 = vmatpush2.bf16.msra.mxu0 0
        %1658 = vmatprep.subr.bf16.mxu0 0
        %1659 = vmatpush2.bf16.msra.mxu0 0
        %1660 = vmatprep.subr.bf16.mxu0 0
        %1661 = vmatpush2.bf16.msra.mxu0 0
        %1662 = vmatprep.subr.bf16.mxu0 0
        %1663 = vmatpush2.bf16.msra.mxu0 0
        %1664 = vmatprep.subr.bf16.mxu0 0
        %1665 = vmatpush2.bf16.msra.mxu0 0
        %1666 = vmatprep.subr.bf16.mxu0 0
        %1667 = vmatpush2.bf16.msra.mxu0 0
        %1668 = vmatprep.subr.bf16.mxu0 0
        %1669 = vmatpush2.bf16.msra.mxu0 0
        %1670 = vmatprep.mubr.bf16.mxu0 0
        %1671 = vmatmul.mubr.bf16.gmra.mxu0 %v1636
        %v1672 = vpop.f32.mrf.mxu0
        %v1673 = vadd.f32 %v1609, %v1672
        %v1674 = vpop.f32.mrf.mxu0
        %v1675 = vpop.f32.mrf.mxu0
        %v1676 = vpop.f32.mrf.mxu0
        %1677 = vdwg.mxu0
        %1678 = vst [vmem:[%s442] sm:$0xff] %v1673
        %p1679 = scmp.lt.s32.totalorder %s21, 1
        %s1680 = scalar_select %p1679, %s21, 1
        %s1681 = smul.addr %s1680, 8
        %s1682 = scalar_lea.vmem %s10, %s1681
        // Predicated region
        $region102: #{shred_forward.1} parent=96 // pred_check
          %p1683 = pneg %p259
        $region103: #{shred_forward.1} parent=96 // pred_check_branch
          %1685 = sbr.rel (%p1683) target = $region105
        $region104: #{shred_forward.1} parent=96 // pred_region
          _
        $region105: #{shred_forward.1} parent=96 // pred_fallthru
          _
      $region97: #{shred_forward.1} parent=5 // pred_fallthru
        _
      %p1686 = scmp.le.s32.totalorder 2, %s16
      // Predicated region
      $region106: #{shred_forward.1} parent=5 // pred_check
        %p1687 = pneg %p1686
      $region107: #{shred_forward.1} parent=5 // pred_check_branch
        %1689 = sbr.rel (%p1687) target = $region109
      $region108: #{shred_forward.1} parent=5 // pred_region
        %s1690 = ssub.s32 %s16, 2
        // Predicated region
        $region110: #{shred_forward.1} parent=108 // pred_check
          %p1691 = pneg %p265
        $region111: #{shred_forward.1} parent=108 // pred_check_branch
          %1693 = sbr.rel (%p1691) target = $region113
        $region112: #{shred_forward.1} parent=108 // pred_region
          %p1694 = scmp.lt.s32.totalorder %s22, 1
          %s1695 = scalar_select %p1694, %s22, 1
          %s1696 = smul.addr %s1695, 8
          %s1697 = scalar_lea.vmem %s10, %s1696
        $region113: #{shred_forward.1} parent=108 // pred_fallthru
          _
      $region109: #{shred_forward.1} parent=5 // pred_fallthru
        _
    $region6: #{shred_forward.1} parent=1 // loop_footer
      %s20 = sadd.s32 1, %s16
    $region7: #{shred_forward.1} parent=1 // loop_footer_branch
      %15 = sbr.rel target = $region3
    $region8: #{shred_forward.1} parent=1 // loop_exit
      _

</llo_original>
